<compile_context>
chip_gen: v5e
topology: v5e:2x2
jax: 0.10.0
libtpu: 0.0.40
codegen_flags: <defaults>
</compile_context>

<pallas_src>
import functools

import jax
import jax.numpy as jnp
from jax.experimental import pallas as pl
from jax.experimental.pallas import tpu as pltpu


def _mhsa_kernel(x_ref, wq_ref, bq_ref, wk_ref, bk_ref, wv_ref, bv_ref,
                 wo_ref, bo_ref, o_ref, acc_ref, *, head_dim):
    # Grid point = (batch element, head).
    h = pl.program_id(1)
    nh = pl.num_programs(1)

    @pl.when(h == 0)
    def _():
        acc_ref[...] = jnp.zeros_like(acc_ref)

    cdt = x_ref.dtype                       # compute dtype for MXU operands
    x = x_ref[...]                          # (L, H), native dtype
    scale = 1.0 / (head_dim ** 0.5)

    # Per-head projections: (L, H) @ (H, hd), f32 accumulation on the MXU.
    q = jnp.dot(x, wq_ref[...], preferred_element_type=jnp.float32) + bq_ref[...]
    k = jnp.dot(x, wk_ref[...], preferred_element_type=jnp.float32) + bk_ref[...]
    v = jnp.dot(x, wv_ref[...], preferred_element_type=jnp.float32) + bv_ref[...]

    # Fold the softmax scale into q and drop operands back to the input dtype
    # so the scores matmul runs at full MXU rate for bf16 inputs.
    q = (q * scale).astype(cdt)             # (L, hd)
    k = k.astype(cdt)                       # (L, hd)
    v = v.astype(cdt)                       # (L, hd)

    # scores = (Q*scale) @ K^T -- contract head_dim of both operands directly
    # (no K transpose materialized).
    s = jax.lax.dot_general(q, k, (((1,), (1,)), ((), ())),
                            preferred_element_type=jnp.float32)   # (L, L) f32

    # Numerically-stable softmax with deferred normalization: normalize the
    # small (L, hd) context instead of the (L, L) probabilities; the
    # reciprocal goes to the (otherwise idle) EUP slot.
    s = s - jnp.max(s, axis=-1, keepdims=True)
    p = jnp.exp(s)
    row_sum = jnp.sum(p, axis=-1, keepdims=True)                  # (L, 1) f32

    # dropout on attn: eval-mode identity (see TODO at top of file)

    ctx = jnp.dot(p.astype(cdt), v,
                  preferred_element_type=jnp.float32)             # (L, hd) f32
    ctx = ctx * pl.reciprocal(row_sum, approx=True)

    # Partial output projection for this head: (L, hd) @ (hd, H), accumulated
    # across the head grid axis into the f32 scratch.
    acc_ref[...] += jnp.dot(ctx.astype(cdt), wo_ref[...],
                            preferred_element_type=jnp.float32)

    @pl.when(h == nh - 1)
    def _():
        # output bias + (identity) dropout, single writeback per batch element
        o_ref[...] = (acc_ref[...] + bo_ref[...]).astype(o_ref.dtype)


@functools.partial(jax.jit, static_argnames=("num_heads",))
def multi_head_self_attention(x, wq, bq, wk, bk, wv, bv, wo, bo, *, num_heads):
    """x: (B, L, H); w*: (H, H) stored as (in, out); b*: (H,)."""
    B, L, H = x.shape
    assert H % num_heads == 0
    head_dim = H // num_heads
    # Lane-aligned per-head weight slices (see TODO for head_dim < 128).
    assert head_dim % 128 == 0 or head_dim == H

    # Biases as f32 rows so they broadcast over f32 accumulators.
    bq_r = bq.reshape(1, H).astype(jnp.float32)
    bk_r = bk.reshape(1, H).astype(jnp.float32)
    bv_r = bv.reshape(1, H).astype(jnp.float32)
    bo_r = bo.reshape(1, H).astype(jnp.float32)

    kernel = functools.partial(_mhsa_kernel, head_dim=head_dim)

    # Per-head slices of the projection weights/biases (column blocks) and of
    # the output projection (row blocks).
    qkv_w_spec = pl.BlockSpec((H, head_dim), lambda b, h: (0, h))
    qkv_b_spec = pl.BlockSpec((1, head_dim), lambda b, h: (0, h))
    wo_spec = pl.BlockSpec((head_dim, H), lambda b, h: (h, 0))
    bo_spec = pl.BlockSpec((1, H), lambda b, h: (0, 0))

    itemsize = jnp.dtype(x.dtype).itemsize
    cost = pl.CostEstimate(
        flops=8 * B * L * H * H + 4 * B * L * L * H,
        transcendentals=B * num_heads * L * L,
        bytes_accessed=(2 * B * L * H + 4 * H * H + 4 * H) * itemsize,
    )

    return pl.pallas_call(
        kernel,
        out_shape=jax.ShapeDtypeStruct((B, L, H), x.dtype),
        grid_spec=pltpu.PrefetchScalarGridSpec(
            num_scalar_prefetch=0,
            grid=(B, num_heads),
            in_specs=[
                pl.BlockSpec((None, L, H), lambda b, h: (b, 0, 0)),  # x slab
                qkv_w_spec, qkv_b_spec,                              # Wq, bq
                qkv_w_spec, qkv_b_spec,                              # Wk, bk
                qkv_w_spec, qkv_b_spec,                              # Wv, bv
                wo_spec, bo_spec,                                    # Wo, bo
            ],
            out_specs=pl.BlockSpec((None, L, H), lambda b, h: (b, 0, 0)),
            scratch_shapes=[pltpu.VMEM((L, H), jnp.float32)],        # out acc
        ),
        compiler_params=pltpu.CompilerParams(
            dimension_semantics=("parallel", "arbitrary"),
            vmem_limit_bytes=64 * 1024 * 1024,
        ),
        cost_estimate=cost,
    )(x, wq, bq_r, wk, bk_r, wv, bv_r, wo, bo_r)


def _reference(x, wq, bq, wk, bk, wv, bv, wo, bo, num_heads):
    B, L, H = x.shape
    hd = H // num_heads
    q = jnp.einsum("blh,hk->blk", x, wq) + bq
    k = jnp.einsum("blh,hk->blk", x, wk) + bk
    v = jnp.einsum("blh,hk->blk", x, wv) + bv
    q = q.reshape(B, L, num_heads, hd).transpose(0, 2, 1, 3)
    k = k.reshape(B, L, num_heads, hd).transpose(0, 2, 1, 3)
    v = v.reshape(B, L, num_heads, hd).transpose(0, 2, 1, 3)
    s = jnp.einsum("bhqd,bhkd->bhqk", q, k) / (hd ** 0.5)
    p = jax.nn.softmax(s, axis=-1)
    ctx = jnp.einsum("bhqk,bhkd->bhqd", p, v)
    ctx = ctx.transpose(0, 2, 1, 3).reshape(B, L, H)
    return jnp.einsum("blh,hk->blk", ctx, wo) + bo


if __name__ == "__main__":
    # Small but lane-dense shapes: hidden / head_dim / seq multiples of 128.
    batch, seq, hidden, num_heads = 2, 128, 256, 2

    key = jax.random.PRNGKey(0)
    keys = jax.random.split(key, 9)

    x = jax.random.normal(keys[0], (batch, seq, hidden), dtype=jnp.float32)

    def lin_params(kw, kb, fan_in, fan_out):
        w = 0.02 * jax.random.normal(kw, (fan_in, fan_out), dtype=jnp.float32)
        b = 0.01 * jax.random.normal(kb, (fan_out,), dtype=jnp.float32)
        return w, b

    wq, bq = lin_params(keys[1], keys[2], hidden, hidden)
    wk, bk = lin_params(keys[3], keys[4], hidden, hidden)
    wv, bv = lin_params(keys[5], keys[6], hidden, hidden)
    wo, bo = lin_params(keys[7], keys[8], hidden, hidden)

    out = multi_head_self_attention(x, wq, bq, wk, bk, wv, bv, wo, bo,
                                    num_heads=num_heads)
    jax.block_until_ready(out)

    ref = _reference(x, wq, bq, wk, bk, wv, bv, wo, bo, num_heads)
    assert out.shape == (batch, seq, hidden)
    # Tolerance widened slightly for the EUP approximate reciprocal.
    assert jnp.allclose(out, ref, atol=2e-3, rtol=2e-3), \
        float(jnp.max(jnp.abs(out - ref)))

    print("KERNEL_OK")
</pallas_src>

<mosaic_0001>
module attributes {stable_mosaic.version = 11 : i64} {
  func.func @_mhsa_kernel(%arg0: i32, %arg1: i32, %arg2: memref<1x128x256xf32, #tpu.memory_space<vmem>>, %arg3: memref<256x128xf32, #tpu.memory_space<vmem>>, %arg4: memref<1x128xf32, #tpu.memory_space<vmem>>, %arg5: memref<256x128xf32, #tpu.memory_space<vmem>>, %arg6: memref<1x128xf32, #tpu.memory_space<vmem>>, %arg7: memref<256x128xf32, #tpu.memory_space<vmem>>, %arg8: memref<1x128xf32, #tpu.memory_space<vmem>>, %arg9: memref<128x256xf32, #tpu.memory_space<vmem>>, %arg10: memref<1x256xf32, #tpu.memory_space<vmem>>, %arg11: memref<1x128x256xf32, #tpu.memory_space<vmem>>, %arg12: memref<128x256xf32, #tpu.memory_space<vmem>>) attributes {dimension_semantics = [#tpu.dimension_semantics<parallel>, #tpu.dimension_semantics<arbitrary>], iteration_bounds = array<i64: 2, 2>, scalar_prefetch = 0 : i64, scratch_operands = 1 : i64, tpu.core_type = #tpu.core_type<tc>, window_params = [{transform_indices = @transform_0, window_bounds = array<i64: 1, 128, 256>}, {transform_indices = @transform_1, window_bounds = array<i64: 256, 128>}, {transform_indices = @transform_2, window_bounds = array<i64: 1, 128>}, {transform_indices = @transform_3, window_bounds = array<i64: 256, 128>}, {transform_indices = @transform_4, window_bounds = array<i64: 1, 128>}, {transform_indices = @transform_5, window_bounds = array<i64: 256, 128>}, {transform_indices = @transform_6, window_bounds = array<i64: 1, 128>}, {transform_indices = @transform_7, window_bounds = array<i64: 128, 256>}, {pipeline_mode = #tpu.pipeline_mode<synchronous>, transform_indices = @transform_8, window_bounds = array<i64: 1, 256>}, {transform_indices = @transform_9, window_bounds = array<i64: 1, 128, 256>}]} {
    %c0_i32 = arith.constant 0 : i32
    %0 = arith.cmpi eq, %arg1, %c0_i32 : i32
    %1 = arith.extui %0 : i1 to i32
    %c0_i32_0 = arith.constant 0 : i32
    %2 = arith.cmpi ne, %1, %c0_i32_0 : i32
    scf.if %2 {
      %cst_30 = arith.constant 0.000000e+00 : f32
      %42 = vector.broadcast %cst_30 : f32 to vector<128x256xf32>
      %c0_31 = arith.constant 0 : index
      %c0_32 = arith.constant 0 : index
      %43 = vector.load %arg12[%c0_31, %c0_32] : memref<128x256xf32, #tpu.memory_space<vmem>>, vector<128x256xf32>
      tpu.vector_store %arg12[%c0_31, %c0_32], %42 {strides = array<i32>} : memref<128x256xf32, #tpu.memory_space<vmem>>, vector<128x256xf32>,
    } else {
    }
    %c0 = arith.constant 0 : index
    %c0_1 = arith.constant 0 : index
    %c0_2 = arith.constant 0 : index
    %3 = vector.load %arg2[%c0, %c0_1, %c0_2] : memref<1x128x256xf32, #tpu.memory_space<vmem>>, vector<1x128x256xf32>
    %4 = vector.shape_cast %3 : vector<1x128x256xf32> to vector<128x256xf32>
    %c0_3 = arith.constant 0 : index
    %c0_4 = arith.constant 0 : index
    %5 = vector.load %arg3[%c0_3, %c0_4] : memref<256x128xf32, #tpu.memory_space<vmem>>, vector<256x128xf32>
    %cst = arith.constant dense<0.000000e+00> : vector<128x128xf32>
    %6 = tpu.matmul %4, %5, %cst {dimension_numbers = #tpu.dot_dimension_numbers<[1], [0], [0], [1], [0, 0, 1, 1], [], []>} : vector<128x256xf32>, vector<256x128xf32>, vector<128x128xf32> -> vector<128x128xf32>
    %c0_5 = arith.constant 0 : index
    %c0_6 = arith.constant 0 : index
    %7 = vector.load %arg4[%c0_5, %c0_6] : memref<1x128xf32, #tpu.memory_space<vmem>>, vector<1x128xf32>
    %8 = vector.broadcast %7 : vector<1x128xf32> to vector<128x128xf32>
    %9 = arith.addf %6, %8 : vector<128x128xf32>
    %c0_7 = arith.constant 0 : index
    %c0_8 = arith.constant 0 : index
    %10 = vector.load %arg5[%c0_7, %c0_8] : memref<256x128xf32, #tpu.memory_space<vmem>>, vector<256x128xf32>
    %cst_9 = arith.constant dense<0.000000e+00> : vector<128x128xf32>
    %11 = tpu.matmul %4, %10, %cst_9 {dimension_numbers = #tpu.dot_dimension_numbers<[1], [0], [0], [1], [0, 0, 1, 1], [], []>} : vector<128x256xf32>, vector<256x128xf32>, vector<128x128xf32> -> vector<128x128xf32>
    %c0_10 = arith.constant 0 : index
    %c0_11 = arith.constant 0 : index
    %12 = vector.load %arg6[%c0_10, %c0_11] : memref<1x128xf32, #tpu.memory_space<vmem>>, vector<1x128xf32>
    %13 = vector.broadcast %12 : vector<1x128xf32> to vector<128x128xf32>
    %14 = arith.addf %11, %13 : vector<128x128xf32>
    %c0_12 = arith.constant 0 : index
    %c0_13 = arith.constant 0 : index
    %15 = vector.load %arg7[%c0_12, %c0_13] : memref<256x128xf32, #tpu.memory_space<vmem>>, vector<256x128xf32>
    %cst_14 = arith.constant dense<0.000000e+00> : vector<128x128xf32>
    %16 = tpu.matmul %4, %15, %cst_14 {dimension_numbers = #tpu.dot_dimension_numbers<[1], [0], [0], [1], [0, 0, 1, 1], [], []>} : vector<128x256xf32>, vector<256x128xf32>, vector<128x128xf32> -> vector<128x128xf32>
    %c0_15 = arith.constant 0 : index
    %c0_16 = arith.constant 0 : index
    %17 = vector.load %arg8[%c0_15, %c0_16] : memref<1x128xf32, #tpu.memory_space<vmem>>, vector<1x128xf32>
    %18 = vector.broadcast %17 : vector<1x128xf32> to vector<128x128xf32>
    %19 = arith.addf %16, %18 : vector<128x128xf32>
    %cst_17 = arith.constant 0.0883883461 : f32
    %20 = vector.broadcast %cst_17 : f32 to vector<128x128xf32>
    %21 = arith.mulf %9, %20 : vector<128x128xf32>
    %cst_18 = arith.constant dense<0.000000e+00> : vector<128x128xf32>
    %22 = tpu.matmul %21, %14, %cst_18 {dimension_numbers = #tpu.dot_dimension_numbers<[1], [1], [0], [0], [0, 0, 1, 0], [], []>} : vector<128x128xf32>, vector<128x128xf32>, vector<128x128xf32> -> vector<128x128xf32>
    %cst_19 = arith.constant dense<0xFF800000> : vector<128xf32>
    %23 = vector.multi_reduction <maximumf>, %22, %cst_19 [1] : vector<128x128xf32> to vector<128xf32>
    %24 = vector.shape_cast %23 : vector<128xf32> to vector<128x1xf32>
    %25 = vector.broadcast %24 : vector<128x1xf32> to vector<128x128xf32>
    %26 = arith.subf %22, %25 : vector<128x128xf32>
    %27 = math.exp %26 : vector<128x128xf32>
    %cst_20 = arith.constant dense<0.000000e+00> : vector<128xf32>
    %28 = vector.multi_reduction <add>, %27, %cst_20 [1] : vector<128x128xf32> to vector<128xf32>
    %29 = vector.shape_cast %28 : vector<128xf32> to vector<128x1xf32>
    %cst_21 = arith.constant dense<0.000000e+00> : vector<128x128xf32>
    %30 = tpu.matmul %27, %19, %cst_21 {dimension_numbers = #tpu.dot_dimension_numbers<[1], [0], [0], [1], [0, 0, 1, 1], [], []>} : vector<128x128xf32>, vector<128x128xf32>, vector<128x128xf32> -> vector<128x128xf32>
    %31 = tpu.reciprocal %29 {approx = true} : vector<128x1xf32> -> vector<128x1xf32>
    %32 = vector.broadcast %31 : vector<128x1xf32> to vector<128x128xf32>
    %33 = arith.mulf %30, %32 : vector<128x128xf32>
    %c0_22 = arith.constant 0 : index
    %c0_23 = arith.constant 0 : index
    %34 = vector.load %arg12[%c0_22, %c0_23] : memref<128x256xf32, #tpu.memory_space<vmem>>, vector<128x256xf32>
    %c0_24 = arith.constant 0 : index
    %c0_25 = arith.constant 0 : index
    %35 = vector.load %arg9[%c0_24, %c0_25] : memref<128x256xf32, #tpu.memory_space<vmem>>, vector<128x256xf32>
    %cst_26 = arith.constant dense<0.000000e+00> : vector<128x256xf32>
    %36 = tpu.matmul %33, %35, %cst_26 {dimension_numbers = #tpu.dot_dimension_numbers<[1], [0], [0], [1], [0, 0, 1, 1], [], []>} : vector<128x128xf32>, vector<128x256xf32>, vector<128x256xf32> -> vector<128x256xf32>
    %37 = arith.addf %34, %36 : vector<128x256xf32>
    %c0_27 = arith.constant 0 : index
    %c0_28 = arith.constant 0 : index
    %38 = vector.load %arg12[%c0_27, %c0_28] : memref<128x256xf32, #tpu.memory_space<vmem>>, vector<128x256xf32>
    tpu.vector_store %arg12[%c0_27, %c0_28], %37 {strides = array<i32>} : memref<128x256xf32, #tpu.memory_space<vmem>>, vector<128x256xf32>,
    %c1_i32 = arith.constant 1 : i32
    %39 = arith.cmpi eq, %arg1, %c1_i32 : i32
    %40 = arith.extui %39 : i1 to i32
    %c0_i32_29 = arith.constant 0 : i32
    %41 = arith.cmpi ne, %40, %c0_i32_29 : i32
    scf.if %41 {
      %c0_30 = arith.constant 0 : index
      %c0_31 = arith.constant 0 : index
      %42 = vector.load %arg12[%c0_30, %c0_31] : memref<128x256xf32, #tpu.memory_space<vmem>>, vector<128x256xf32>
      %c0_32 = arith.constant 0 : index
      %c0_33 = arith.constant 0 : index
      %43 = vector.load %arg10[%c0_32, %c0_33] : memref<1x256xf32, #tpu.memory_space<vmem>>, vector<1x256xf32>
      %44 = vector.broadcast %43 : vector<1x256xf32> to vector<128x256xf32>
      %45 = arith.addf %42, %44 : vector<128x256xf32>
      %c0_34 = arith.constant 0 : index
      %c0_35 = arith.constant 0 : index
      %c0_36 = arith.constant 0 : index
      %46 = vector.load %arg11[%c0_34, %c0_35, %c0_36] : memref<1x128x256xf32, #tpu.memory_space<vmem>>, vector<1x128x256xf32>
      %47 = vector.shape_cast %46 : vector<1x128x256xf32> to vector<128x256xf32>
      %48 = vector.shape_cast %45 : vector<128x256xf32> to vector<1x128x256xf32>
      tpu.vector_store %arg11[%c0_34, %c0_35, %c0_36], %48 {strides = array<i32>} : memref<1x128x256xf32, #tpu.memory_space<vmem>>, vector<1x128x256xf32>,
    } else {
    }
    return
  }
  func.func @transform_0(%arg0: i32, %arg1: i32) -> (i32, i32, i32) {
    %c0_i32 = arith.constant 0 : i32
    %c0_i32_0 = arith.constant 0 : i32
    %c0_i32_1 = arith.constant 0 : i32
    return %arg0, %c0_i32, %c0_i32_0 : i32, i32, i32
  }
  func.func @transform_1(%arg0: i32, %arg1: i32) -> (i32, i32) {
    %c0_i32 = arith.constant 0 : i32
    %c0_i32_0 = arith.constant 0 : i32
    return %c0_i32, %arg1 : i32, i32
  }
  func.func @transform_2(%arg0: i32, %arg1: i32) -> (i32, i32) {
    %c0_i32 = arith.constant 0 : i32
    %c0_i32_0 = arith.constant 0 : i32
    return %c0_i32, %arg1 : i32, i32
  }
  func.func @transform_3(%arg0: i32, %arg1: i32) -> (i32, i32) {
    %c0_i32 = arith.constant 0 : i32
    %c0_i32_0 = arith.constant 0 : i32
    return %c0_i32, %arg1 : i32, i32
  }
  func.func @transform_4(%arg0: i32, %arg1: i32) -> (i32, i32) {
    %c0_i32 = arith.constant 0 : i32
    %c0_i32_0 = arith.constant 0 : i32
    return %c0_i32, %arg1 : i32, i32
  }
  func.func @transform_5(%arg0: i32, %arg1: i32) -> (i32, i32) {
    %c0_i32 = arith.constant 0 : i32
    %c0_i32_0 = arith.constant 0 : i32
    return %c0_i32, %arg1 : i32, i32
  }
  func.func @transform_6(%arg0: i32, %arg1: i32) -> (i32, i32) {
    %c0_i32 = arith.constant 0 : i32
    %c0_i32_0 = arith.constant 0 : i32
    return %c0_i32, %arg1 : i32, i32
  }
  func.func @transform_7(%arg0: i32, %arg1: i32) -> (i32, i32) {
    %c0_i32 = arith.constant 0 : i32
    %c0_i32_0 = arith.constant 0 : i32
    return %arg1, %c0_i32 : i32, i32
  }
  func.func @transform_8(%arg0: i32, %arg1: i32) -> (i32, i32) {
    %c0_i32 = arith.constant 0 : i32
    %c0_i32_0 = arith.constant 0 : i32
    %c0_i32_1 = arith.constant 0 : i32
    return %c0_i32, %c0_i32_0 : i32, i32
  }
  func.func @transform_9(%arg0: i32, %arg1: i32) -> (i32, i32, i32) {
    %c0_i32 = arith.constant 0 : i32
    %c0_i32_0 = arith.constant 0 : i32
    %c0_i32_1 = arith.constant 0 : i32
    return %arg0, %c0_i32, %c0_i32_0 : i32, i32, i32
  }
}

</mosaic_0001>

<llo_original>
// kernel: multi_head_self_attention.1
$region0: #{multi_head_self_attention.1}
  #allocation0 [shape = 'u32[]', space=smem, size = 0x4, offset = 0x4, fixed_abs, tag = 'smem constant byte address 0x4 - core index']
  #allocation1 [shape = 'u32[72,128]{1,0:T(1,128)}', space=vmem, size = 0x9000, scoped, tag = 'internal scratch']
  #allocation2 [shape = 'f32[128,256]{1,0:T(8,128)}', space=vmem, size = 0x20000, scoped, tag = 'scratch operand']
  %s0 = inlined_call_operand.hbm [shape: f32[2,128,256], index: 0, kind: input, shape index: {}]
  %s1 = inlined_call_operand.hbm [shape: f32[256,256], index: 1, kind: input, shape index: {}]
  %s2 = inlined_call_operand.vmem [shape: f32[1,256], index: 2, kind: input, shape index: {}]
  %s3 = inlined_call_operand.hbm [shape: f32[256,256], index: 3, kind: input, shape index: {}]
  %s4 = inlined_call_operand.vmem [shape: f32[1,256], index: 4, kind: input, shape index: {}]
  %s5 = inlined_call_operand.hbm [shape: f32[256,256], index: 5, kind: input, shape index: {}]
  %s6 = inlined_call_operand.vmem [shape: f32[1,256], index: 6, kind: input, shape index: {}]
  %s7 = inlined_call_operand.hbm [shape: f32[256,256], index: 7, kind: input, shape index: {}]
  %s8 = inlined_call_operand.vmem [shape: f32[1,256], index: 8, kind: input, shape index: {}]
  %s9 = inlined_call_operand.hbm [shape: f32[2,128,256], index: 9, kind: output, shape index: {}]
  %s10 = sld [smem:[#allocation0]]
  $region97: #{multi_head_self_attention.1} parent=0
    _
  %s12 = ssub.s32 1, %s10
  %s13 = scalar_select 0, %s12, %s10
  $region1: #{multi_head_self_attention.1} parent=0
    #allocation3 [shape = 'u8[262144]{0}', space=vmem, size = 0x40000, scoped, tag = 'input window, operand 0']
    #allocation4 [shape = 's32[2]{0}', space=sflag, size = 0x8, scoped, tag = 'scoped memory for multi_head_self_attention.1']
    #allocation5 [shape = 's32[2]{0}', space=sflag, size = 0x8, scoped, tag = 'scoped memory for multi_head_self_attention.1']
    #allocation6 [shape = 'u8[262144]{0}', space=vmem, size = 0x40000, scoped, tag = 'input window, operand 1']
    #allocation7 [shape = 's32[2]{0}', space=sflag, size = 0x8, scoped, tag = 'scoped memory for multi_head_self_attention.1']
    #allocation8 [shape = 'u8[262144]{0}', space=vmem, size = 0x40000, scoped, tag = 'input window, operand 3']
    #allocation9 [shape = 'u8[262144]{0}', space=vmem, size = 0x40000, scoped, tag = 'input window, operand 5']
    #allocation10 [shape = 's32[2]{0}', space=sflag, size = 0x8, scoped, tag = 'scoped memory for multi_head_self_attention.1']
    #allocation11 [shape = 'u8[262144]{0}', space=vmem, size = 0x40000, scoped, tag = 'input window, operand 7']
    #allocation12 [shape = 'u8[262144]{0}', space=vmem, size = 0x40000, scoped, tag = 'output window, operand 0']
    %14 = vsyncpa [#allocation4], 0
    %s15 = scalar_lea.sflag [#allocation4], 1
    %16 = vsyncpa %s15, 0
    %17 = vsyncpa [#allocation7], 0
    %s18 = scalar_lea.sflag [#allocation7], 1
    %19 = vsyncpa %s18, 0
    %20 = vsyncpa [#allocation10], 0
    %s21 = scalar_lea.sflag [#allocation10], 1
    %22 = vsyncpa %s21, 0
    %23 = vsyncpa [#allocation5], 0
    %s24 = scalar_lea.sflag [#allocation5], 1
    %25 = vsyncpa %s24, 0
    loop: start=0, step=1, limit=6
    $region2: #{multi_head_self_attention.1} parent=1 // loop_pre_header
      _
    $region3: #{multi_head_self_attention.1} parent=1 // loop_header
      %s27 = sphi 0, %s31
      %p28 = scmp.ge.s32.totalorder %s27, 6
      %s34 = sphi 0, %s46
      %s35 = sphi 0, %s42
      %s36 = sphi 0, %s34
      %s37 = sphi 0, %s35
      %s38 = sphi 0, %s36
      %s39 = sphi 0, %s37
      %s49 = sphi 0, %s51
      %s52 = sphi 0, %s49
      %s53 = sphi 0, %s52
      %s69 = sphi 0, %s53
      %s75 = sphi 0, %s77
      %s78 = sphi 0, %s75
      %s79 = sphi 0, %s78
      %s95 = sphi 0, %s79
      %s101 = sphi 0, %s103
      %s104 = sphi 0, %s101
      %s105 = sphi 0, %s104
      %s121 = sphi 0, %s105
      %s127 = sphi 0, %s129
      %s130 = sphi 0, %s127
      %s131 = sphi 0, %s130
      %s147 = sphi 0, %s131
      %s153 = sphi 0, %s155
      %s156 = sphi 0, %s153
      %s157 = sphi 0, %s156
      %s173 = sphi 0, %s157
      %s179 = sphi 0, %s181
      %s182 = sphi 0, %s179
      %s183 = sphi 0, %s182
      %s199 = sphi 0, %s183
      %s205 = sphi 0, %s207
      %s208 = sphi 0, %s205
      %s209 = sphi 0, %s208
      %s225 = sphi 0, %s209
      %s231 = sphi 0, %s233
      %s234 = sphi 0, %s231
      %s235 = sphi 0, %s234
      %s251 = sphi 0, %s235
      %s255 = sphi 0, %s255
      %s257 = sphi 0, %s255
      %s258 = sphi 0, %s257
      %s272 = sphi 0, %s258
      %s278 = sphi 0, %s280
      %s281 = sphi 0, %s278
      %s282 = sphi 0, %s281
      %s298 = sphi 0, %s282
    $region4: #{multi_head_self_attention.1} parent=1 // loop_header_branch
      %30 = sbr.rel (%p28) target = $region8
    $region5: #{multi_head_self_attention.1} parent=1 // loop_body
      %s32 = ssub.s32 %s27, 1
      %s33 = ssub.s32 %s27, 2
      %s40 = sadd.s32 1, %s35
      %p41 = scmp.ge.s32.totalorder %s40, 2
      %s42 = scalar_select %p41, 0, %s40
      %s43 = sadd.s32 1, %s34
      %s44 = scalar_select %p41, %s43, %s34
      %p45 = scmp.ge.s32.totalorder %s44, 2
      %s46 = scalar_select %p45, 0, %s44
      %s47 = ssub.s32 %s34, %s46
      %p48 = scmp.eq.s32.totalorder %s47, 0
      %s50 = sadd.s32 %s49, 1
      %s51 = scalar_select %p48, %s49, %s50
      %p54 = pneg %p48
      %p55 = scmp.eq.s32.totalorder %s27, 3
      %p56 = por %p54, %p55
      %p57 = scmp.ne.s32.totalorder %s49, %s52
      %p58 = scmp.eq.s32.totalorder %s27, 0
      %p59 = por %p57, %p58
      %p60 = scmp.ne.s32.totalorder %s49, %s52
      %p61 = scmp.eq.s32.totalorder %s32, 3
      %p62 = por %p60, %p61
      %p63 = scmp.ne.s32.totalorder %s52, %s53
      %p64 = scmp.eq.s32.totalorder %s32, 0
      %p65 = por %p63, %p64
      %p66 = scmp.ne.s32.totalorder %s52, %s53
      %p67 = scmp.eq.s32.totalorder %s33, 3
      %p68 = por %p66, %p67
      %p70 = scmp.ne.s32.totalorder %s53, %s69
      %p71 = scmp.eq.s32.totalorder %s33, 0
      %p72 = por %p70, %p71
      %s73 = ssub.s32 %s35, %s42
      %p74 = scmp.eq.s32.totalorder %s73, 0
      %s76 = sadd.s32 %s75, 1
      %s77 = scalar_select %p74, %s75, %s76
      %p80 = pneg %p74
      %p81 = scmp.eq.s32.totalorder %s27, 3
      %p82 = por %p80, %p81
      %p83 = scmp.ne.s32.totalorder %s75, %s78
      %p84 = scmp.eq.s32.totalorder %s27, 0
      %p85 = por %p83, %p84
      %p86 = scmp.ne.s32.totalorder %s75, %s78
      %p87 = scmp.eq.s32.totalorder %s32, 3
      %p88 = por %p86, %p87
      %p89 = scmp.ne.s32.totalorder %s78, %s79
      %p90 = scmp.eq.s32.totalorder %s32, 0
      %p91 = por %p89, %p90
      %p92 = scmp.ne.s32.totalorder %s78, %s79
      %p93 = scmp.eq.s32.totalorder %s33, 3
      %p94 = por %p92, %p93
      %p96 = scmp.ne.s32.totalorder %s79, %s95
      %p97 = scmp.eq.s32.totalorder %s33, 0
      %p98 = por %p96, %p97
      %s99 = ssub.s32 %s35, %s42
      %p100 = scmp.eq.s32.totalorder %s99, 0
      %s102 = sadd.s32 %s101, 1
      %s103 = scalar_select %p100, %s101, %s102
      %p106 = pneg %p100
      %p107 = scmp.eq.s32.totalorder %s27, 3
      %p108 = por %p106, %p107
      %p109 = scmp.ne.s32.totalorder %s101, %s104
      %p110 = scmp.eq.s32.totalorder %s27, 0
      %p111 = por %p109, %p110
      %p112 = scmp.ne.s32.totalorder %s101, %s104
      %p113 = scmp.eq.s32.totalorder %s32, 3
      %p114 = por %p112, %p113
      %p115 = scmp.ne.s32.totalorder %s104, %s105
      %p116 = scmp.eq.s32.totalorder %s32, 0
      %p117 = por %p115, %p116
      %p118 = scmp.ne.s32.totalorder %s104, %s105
      %p119 = scmp.eq.s32.totalorder %s33, 3
      %p120 = por %p118, %p119
      %p122 = scmp.ne.s32.totalorder %s105, %s121
      %p123 = scmp.eq.s32.totalorder %s33, 0
      %p124 = por %p122, %p123
      %s125 = ssub.s32 %s35, %s42
      %p126 = scmp.eq.s32.totalorder %s125, 0
      %s128 = sadd.s32 %s127, 1
      %s129 = scalar_select %p126, %s127, %s128
      %p132 = pneg %p126
      %p133 = scmp.eq.s32.totalorder %s27, 3
      %p134 = por %p132, %p133
      %p135 = scmp.ne.s32.totalorder %s127, %s130
      %p136 = scmp.eq.s32.totalorder %s27, 0
      %p137 = por %p135, %p136
      %p138 = scmp.ne.s32.totalorder %s127, %s130
      %p139 = scmp.eq.s32.totalorder %s32, 3
      %p140 = por %p138, %p139
      %p141 = scmp.ne.s32.totalorder %s130, %s131
      %p142 = scmp.eq.s32.totalorder %s32, 0
      %p143 = por %p141, %p142
      %p144 = scmp.ne.s32.totalorder %s130, %s131
      %p145 = scmp.eq.s32.totalorder %s33, 3
      %p146 = por %p144, %p145
      %p148 = scmp.ne.s32.totalorder %s131, %s147
      %p149 = scmp.eq.s32.totalorder %s33, 0
      %p150 = por %p148, %p149
      %s151 = ssub.s32 %s35, %s42
      %p152 = scmp.eq.s32.totalorder %s151, 0
      %s154 = sadd.s32 %s153, 1
      %s155 = scalar_select %p152, %s153, %s154
      %p158 = pneg %p152
      %p159 = scmp.eq.s32.totalorder %s27, 3
      %p160 = por %p158, %p159
      %p161 = scmp.ne.s32.totalorder %s153, %s156
      %p162 = scmp.eq.s32.totalorder %s27, 0
      %p163 = por %p161, %p162
      %p164 = scmp.ne.s32.totalorder %s153, %s156
      %p165 = scmp.eq.s32.totalorder %s32, 3
      %p166 = por %p164, %p165
      %p167 = scmp.ne.s32.totalorder %s156, %s157
      %p168 = scmp.eq.s32.totalorder %s32, 0
      %p169 = por %p167, %p168
      %p170 = scmp.ne.s32.totalorder %s156, %s157
      %p171 = scmp.eq.s32.totalorder %s33, 3
      %p172 = por %p170, %p171
      %p174 = scmp.ne.s32.totalorder %s157, %s173
      %p175 = scmp.eq.s32.totalorder %s33, 0
      %p176 = por %p174, %p175
      %s177 = ssub.s32 %s35, %s42
      %p178 = scmp.eq.s32.totalorder %s177, 0
      %s180 = sadd.s32 %s179, 1
      %s181 = scalar_select %p178, %s179, %s180
      %p184 = pneg %p178
      %p185 = scmp.eq.s32.totalorder %s27, 3
      %p186 = por %p184, %p185
      %p187 = scmp.ne.s32.totalorder %s179, %s182
      %p188 = scmp.eq.s32.totalorder %s27, 0
      %p189 = por %p187, %p188
      %p190 = scmp.ne.s32.totalorder %s179, %s182
      %p191 = scmp.eq.s32.totalorder %s32, 3
      %p192 = por %p190, %p191
      %p193 = scmp.ne.s32.totalorder %s182, %s183
      %p194 = scmp.eq.s32.totalorder %s32, 0
      %p195 = por %p193, %p194
      %p196 = scmp.ne.s32.totalorder %s182, %s183
      %p197 = scmp.eq.s32.totalorder %s33, 3
      %p198 = por %p196, %p197
      %p200 = scmp.ne.s32.totalorder %s183, %s199
      %p201 = scmp.eq.s32.totalorder %s33, 0
      %p202 = por %p200, %p201
      %s203 = ssub.s32 %s35, %s42
      %p204 = scmp.eq.s32.totalorder %s203, 0
      %s206 = sadd.s32 %s205, 1
      %s207 = scalar_select %p204, %s205, %s206
      %p210 = pneg %p204
      %p211 = scmp.eq.s32.totalorder %s27, 3
      %p212 = por %p210, %p211
      %p213 = scmp.ne.s32.totalorder %s205, %s208
      %p214 = scmp.eq.s32.totalorder %s27, 0
      %p215 = por %p213, %p214
      %p216 = scmp.ne.s32.totalorder %s205, %s208
      %p217 = scmp.eq.s32.totalorder %s32, 3
      %p218 = por %p216, %p217
      %p219 = scmp.ne.s32.totalorder %s208, %s209
      %p220 = scmp.eq.s32.totalorder %s32, 0
      %p221 = por %p219, %p220
      %p222 = scmp.ne.s32.totalorder %s208, %s209
      %p223 = scmp.eq.s32.totalorder %s33, 3
      %p224 = por %p222, %p223
      %p226 = scmp.ne.s32.totalorder %s209, %s225
      %p227 = scmp.eq.s32.totalorder %s33, 0
      %p228 = por %p226, %p227
      %s229 = ssub.s32 %s35, %s42
      %p230 = scmp.eq.s32.totalorder %s229, 0
      %s232 = sadd.s32 %s231, 1
      %s233 = scalar_select %p230, %s231, %s232
      %p236 = pneg %p230
      %p237 = scmp.eq.s32.totalorder %s27, 3
      %p238 = por %p236, %p237
      %p239 = scmp.ne.s32.totalorder %s231, %s234
      %p240 = scmp.eq.s32.totalorder %s27, 0
      %p241 = por %p239, %p240
      %p242 = scmp.ne.s32.totalorder %s231, %s234
      %p243 = scmp.eq.s32.totalorder %s32, 3
      %p244 = por %p242, %p243
      %p245 = scmp.ne.s32.totalorder %s234, %s235
      %p246 = scmp.eq.s32.totalorder %s32, 0
      %p247 = por %p245, %p246
      %p248 = scmp.ne.s32.totalorder %s234, %s235
      %p249 = scmp.eq.s32.totalorder %s33, 3
      %p250 = por %p248, %p249
      %p252 = scmp.ne.s32.totalorder %s235, %s251
      %p253 = scmp.eq.s32.totalorder %s33, 0
      %p254 = por %p252, %p253
      %s256 = sadd.s32 %s255, 1
      %p259 = scmp.eq.s32.totalorder %s27, 3
      %p260 = scmp.ne.s32.totalorder %s255, %s257
      %p261 = scmp.eq.s32.totalorder %s27, 0
      %p262 = por %p260, %p261
      %p263 = scmp.ne.s32.totalorder %s255, %s257
      %p264 = scmp.eq.s32.totalorder %s32, 3
      %p265 = por %p263, %p264
      %p266 = scmp.ne.s32.totalorder %s257, %s258
      %p267 = scmp.eq.s32.totalorder %s32, 0
      %p268 = por %p266, %p267
      %p269 = scmp.ne.s32.totalorder %s257, %s258
      %p270 = scmp.eq.s32.totalorder %s33, 3
      %p271 = por %p269, %p270
      %p273 = scmp.ne.s32.totalorder %s258, %s272
      %p274 = scmp.eq.s32.totalorder %s33, 0
      %p275 = por %p273, %p274
      %s276 = ssub.s32 %s34, %s46
      %p277 = scmp.eq.s32.totalorder %s276, 0
      %s279 = sadd.s32 %s278, 1
      %s280 = scalar_select %p277, %s278, %s279
      %p283 = pneg %p277
      %p284 = scmp.eq.s32.totalorder %s27, 3
      %p285 = por %p283, %p284
      %p286 = scmp.ne.s32.totalorder %s278, %s281
      %p287 = scmp.eq.s32.totalorder %s27, 0
      %p288 = por %p286, %p287
      %p289 = scmp.ne.s32.totalorder %s278, %s281
      %p290 = scmp.eq.s32.totalorder %s32, 3
      %p291 = por %p289, %p290
      %p292 = scmp.ne.s32.totalorder %s281, %s282
      %p293 = scmp.eq.s32.totalorder %s32, 0
      %p294 = por %p292, %p293
      %p295 = scmp.ne.s32.totalorder %s281, %s282
      %p296 = scmp.eq.s32.totalorder %s33, 3
      %p297 = por %p295, %p296
      %p299 = scmp.ne.s32.totalorder %s282, %s298
      %p300 = scmp.eq.s32.totalorder %s33, 0
      %p301 = por %p299, %p300
      %p302 = scmp.le.s32.totalorder 1, %s27
      %p303 = scmp.lt.s32.totalorder %s27, 5
      %p304 = pnand %p302, %p303
      %p305 = pneg %p304
      // Predicated region
      $region9: #{multi_head_self_attention.1} parent=5 // pred_check
        _
      $region10: #{multi_head_self_attention.1} parent=5 // pred_check_branch
        %307 = sbr.rel (%p304) target = $region12
      $region11: #{multi_head_self_attention.1} parent=5 // pred_region
        %s308 = ssub.s32 %s27, 1
        // Predicated region
        $region13: #{multi_head_self_attention.1} parent=11 // pred_check
          %p309 = pneg %p268
        $region14: #{multi_head_self_attention.1} parent=11 // pred_check_branch
          %311 = sbr.rel (%p309) target = $region16
        $region15: #{multi_head_self_attention.1} parent=11 // pred_region
          _
        $region16: #{multi_head_self_attention.1} parent=11 // pred_fallthru
          _
      $region12: #{multi_head_self_attention.1} parent=5 // pred_fallthru
        _
      %p312 = scmp.lt.s32.totalorder %s27, 4
      // Predicated region
      $region17: #{multi_head_self_attention.1} parent=5 // pred_check
        %p313 = pneg %p312
      $region18: #{multi_head_self_attention.1} parent=5 // pred_check_branch
        %315 = sbr.rel (%p313) target = $region20
      $region19: #{multi_head_self_attention.1} parent=5 // pred_region
        // Predicated region
        $region21: #{multi_head_self_attention.1} parent=19 // pred_check
          %p316 = pneg %p59
        $region22: #{multi_head_self_attention.1} parent=19 // pred_check_branch
          %318 = sbr.rel (%p316) target = $region24
        $region23: #{multi_head_self_attention.1} parent=19 // pred_region
          %s319 = sand.u32 %s49, 1
          %s320 = scalar_lea.sflag [#allocation4], %s319
          %s321 = sand.u32 %s49, 1
          %s322 = smul.addr %s321, 256
          %s323 = scalar_lea.vmem [#allocation3], %s322
          %325 = vsyncadd %s320, 0
          %s326 = smul.addr %s34, 32
          %s327 = smul.addr %s326, 8
          %s328 = scalar_lea.hbm %s0, %s327
          %s329 = sshll.u32 %s328, 4
          %s330 = int_to_ptr.hbm [resolvable:$true] %s329
          %s331 = sshll.u32 %s323, 4
          %s332 = int_to_ptr.vmem [resolvable:$true] %s331
          %337 = dma.hbm_to_vmem [thread:$0]  %s330, 4096, %s332, %s320, 256, 256, 16
        $region24: #{multi_head_self_attention.1} parent=19 // pred_fallthru
          _
        // Predicated region
        $region25: #{multi_head_self_attention.1} parent=19 // pred_check
          %p338 = pneg %p85
        $region26: #{multi_head_self_attention.1} parent=19 // pred_check_branch
          %340 = sbr.rel (%p338) target = $region28
        $region27: #{multi_head_self_attention.1} parent=19 // pred_region
          %s341 = sand.u32 %s27, 1
          %s342 = scalar_lea.sflag [#allocation7], %s341
          %s343 = sand.u32 %s75, 1
          %s344 = smul.addr %s343, 256
          %s345 = scalar_lea.vmem [#allocation6], %s344
          %347 = vsyncadd %s342, 0
          %s348 = smul.addr %s35, 8
          %s349 = scalar_lea.hbm %s1, %s348
          %s350 = sshll.u32 %s349, 4
          %s351 = int_to_ptr.hbm [resolvable:$true] %s350
          %s352 = sshll.u32 %s345, 4
          %s353 = int_to_ptr.vmem [resolvable:$true] %s352
          %358 = dma.hbm_to_vmem [thread:$0]  %s351, 4096, %s353, %s342, 256, 128, 8
        $region28: #{multi_head_self_attention.1} parent=19 // pred_fallthru
          _
        // Predicated region
        $region29: #{multi_head_self_attention.1} parent=19 // pred_check
          %p359 = pneg %p111
        $region30: #{multi_head_self_attention.1} parent=19 // pred_check_branch
          %361 = sbr.rel (%p359) target = $region32
        $region31: #{multi_head_self_attention.1} parent=19 // pred_region
          %p362 = scmp.lt.s32.totalorder %s35, 1
          %s363 = scalar_select %p362, %s35, 1
          %s364 = scalar_lea.vmem %s2, %s363
        $region32: #{multi_head_self_attention.1} parent=19 // pred_fallthru
          _
        // Predicated region
        $region33: #{multi_head_self_attention.1} parent=19 // pred_check
          %p365 = pneg %p137
        $region34: #{multi_head_self_attention.1} parent=19 // pred_check_branch
          %367 = sbr.rel (%p365) target = $region36
        $region35: #{multi_head_self_attention.1} parent=19 // pred_region
          %s368 = sand.u32 %s27, 1
          %s369 = scalar_lea.sflag [#allocation7], %s368
          %s370 = sand.u32 %s127, 1
          %s371 = smul.addr %s370, 256
          %s372 = scalar_lea.vmem [#allocation8], %s371
          %374 = vsyncadd %s369, 0
          %s375 = smul.addr %s35, 8
          %s376 = scalar_lea.hbm %s3, %s375
          %s377 = sshll.u32 %s376, 4
          %s378 = int_to_ptr.hbm [resolvable:$true] %s377
          %s379 = sshll.u32 %s372, 4
          %s380 = int_to_ptr.vmem [resolvable:$true] %s379
          %385 = dma.hbm_to_vmem [thread:$0]  %s378, 4096, %s380, %s369, 256, 128, 8
        $region36: #{multi_head_self_attention.1} parent=19 // pred_fallthru
          _
        // Predicated region
        $region37: #{multi_head_self_attention.1} parent=19 // pred_check
          %p386 = pneg %p163
        $region38: #{multi_head_self_attention.1} parent=19 // pred_check_branch
          %388 = sbr.rel (%p386) target = $region40
        $region39: #{multi_head_self_attention.1} parent=19 // pred_region
          %p389 = scmp.lt.s32.totalorder %s35, 1
          %s390 = scalar_select %p389, %s35, 1
          %s391 = scalar_lea.vmem %s4, %s390
        $region40: #{multi_head_self_attention.1} parent=19 // pred_fallthru
          _
        // Predicated region
        $region41: #{multi_head_self_attention.1} parent=19 // pred_check
          %p392 = pneg %p189
        $region42: #{multi_head_self_attention.1} parent=19 // pred_check_branch
          %394 = sbr.rel (%p392) target = $region44
        $region43: #{multi_head_self_attention.1} parent=19 // pred_region
          %s395 = sand.u32 %s27, 1
          %s396 = scalar_lea.sflag [#allocation10], %s395
          %s397 = sand.u32 %s179, 1
          %s398 = smul.addr %s397, 256
          %s399 = scalar_lea.vmem [#allocation9], %s398
          %401 = vsyncadd %s396, 0
          %s402 = smul.addr %s35, 8
          %s403 = scalar_lea.hbm %s5, %s402
          %s404 = sshll.u32 %s403, 4
          %s405 = int_to_ptr.hbm [resolvable:$true] %s404
          %s406 = sshll.u32 %s399, 4
          %s407 = int_to_ptr.vmem [resolvable:$true] %s406
          %412 = dma.hbm_to_vmem [thread:$0]  %s405, 4096, %s407, %s396, 256, 128, 8
        $region44: #{multi_head_self_attention.1} parent=19 // pred_fallthru
          _
        // Predicated region
        $region45: #{multi_head_self_attention.1} parent=19 // pred_check
          %p413 = pneg %p215
        $region46: #{multi_head_self_attention.1} parent=19 // pred_check_branch
          %415 = sbr.rel (%p413) target = $region48
        $region47: #{multi_head_self_attention.1} parent=19 // pred_region
          %p416 = scmp.lt.s32.totalorder %s35, 1
          %s417 = scalar_select %p416, %s35, 1
          %s418 = scalar_lea.vmem %s6, %s417
        $region48: #{multi_head_self_attention.1} parent=19 // pred_fallthru
          _
        // Predicated region
        $region49: #{multi_head_self_attention.1} parent=19 // pred_check
          %p419 = pneg %p241
        $region50: #{multi_head_self_attention.1} parent=19 // pred_check_branch
          %421 = sbr.rel (%p419) target = $region52
        $region51: #{multi_head_self_attention.1} parent=19 // pred_region
          %s422 = sand.u32 %s27, 1
          %s423 = scalar_lea.sflag [#allocation10], %s422
          %s424 = sand.u32 %s231, 1
          %s425 = smul.addr %s424, 256
          %s426 = scalar_lea.vmem [#allocation11], %s425
          %s427 = smul.u32 16, %s35
          %429 = vsyncadd %s423, 0
          %s430 = smul.addr %s427, 2
          %s431 = smul.addr %s430, 8
          %s432 = scalar_lea.hbm %s7, %s431
          %s433 = sshll.u32 %s432, 4
          %s434 = int_to_ptr.hbm [resolvable:$true] %s433
          %s435 = sshll.u32 %s426, 4
          %s436 = int_to_ptr.vmem [resolvable:$true] %s435
          %441 = dma.hbm_to_vmem [thread:$0]  %s434, 4096, %s436, %s423, 256, 256, 16
        $region52: #{multi_head_self_attention.1} parent=19 // pred_fallthru
          _
      $region20: #{multi_head_self_attention.1} parent=5 // pred_fallthru
        _
      %p442 = scmp.le.s32.totalorder 1, %s27
      %p443 = scmp.lt.s32.totalorder %s27, 5
      %p444 = pnand %p442, %p443
      %p445 = pneg %p444
      // Predicated region
      $region53: #{multi_head_self_attention.1} parent=5 // pred_check
        _
      $region54: #{multi_head_self_attention.1} parent=5 // pred_check_branch
        %447 = sbr.rel (%p444) target = $region56
      $region55: #{multi_head_self_attention.1} parent=5 // pred_region
        %s448 = ssub.s32 %s27, 1
        %s449 = sand.u32 %s52, 1
        %s450 = scalar_lea.sflag [#allocation4], %s449
        %s451 = sand.u32 %s52, 1
        %s452 = smul.addr %s451, 256
        %s453 = scalar_lea.vmem [#allocation3], %s452
        // Predicated region
        $region57: #{multi_head_self_attention.1} parent=55 // pred_check
          %p454 = pneg %p65
        $region58: #{multi_head_self_attention.1} parent=55 // pred_check_branch
          %456 = sbr.rel (%p454) target = $region60
        $region59: #{multi_head_self_attention.1} parent=55 // pred_region
          %458 = dma.done %s450, 4096
        $region60: #{multi_head_self_attention.1} parent=55 // pred_fallthru
          _
        %s459 = sand.u32 %s32, 1
        %s460 = scalar_lea.sflag [#allocation7], %s459
        %s461 = sand.u32 %s78, 1
        %s462 = smul.addr %s461, 256
        %s463 = scalar_lea.vmem [#allocation6], %s462
        // Predicated region
        $region61: #{multi_head_self_attention.1} parent=55 // pred_check
          %p464 = pneg %p91
        $region62: #{multi_head_self_attention.1} parent=55 // pred_check_branch
          %466 = sbr.rel (%p464) target = $region64
        $region63: #{multi_head_self_attention.1} parent=55 // pred_region
          %468 = dma.done %s460, 4096
        $region64: #{multi_head_self_attention.1} parent=55 // pred_fallthru
          _
        %s469 = sand.u32 %s32, 1
        %s470 = scalar_lea.sflag [#allocation7], %s469
        %s471 = sand.u32 %s130, 1
        %s472 = smul.addr %s471, 256
        %s473 = scalar_lea.vmem [#allocation8], %s472
        // Predicated region
        $region65: #{multi_head_self_attention.1} parent=55 // pred_check
          %p474 = pneg %p143
        $region66: #{multi_head_self_attention.1} parent=55 // pred_check_branch
          %476 = sbr.rel (%p474) target = $region68
        $region67: #{multi_head_self_attention.1} parent=55 // pred_region
          %478 = dma.done %s470, 4096
        $region68: #{multi_head_self_attention.1} parent=55 // pred_fallthru
          _
        %s479 = sand.u32 %s32, 1
        %s480 = scalar_lea.sflag [#allocation10], %s479
        %s481 = sand.u32 %s182, 1
        %s482 = smul.addr %s481, 256
        %s483 = scalar_lea.vmem [#allocation9], %s482
        // Predicated region
        $region69: #{multi_head_self_attention.1} parent=55 // pred_check
          %p484 = pneg %p195
        $region70: #{multi_head_self_attention.1} parent=55 // pred_check_branch
          %486 = sbr.rel (%p484) target = $region72
        $region71: #{multi_head_self_attention.1} parent=55 // pred_region
          %488 = dma.done %s480, 4096
        $region72: #{multi_head_self_attention.1} parent=55 // pred_fallthru
          _
        %s489 = sand.u32 %s32, 1
        %s490 = scalar_lea.sflag [#allocation10], %s489
        %s491 = sand.u32 %s234, 1
        %s492 = smul.addr %s491, 256
        %s493 = scalar_lea.vmem [#allocation11], %s492
        // Predicated region
        $region73: #{multi_head_self_attention.1} parent=55 // pred_check
          %p494 = pneg %p247
        $region74: #{multi_head_self_attention.1} parent=55 // pred_check_branch
          %496 = sbr.rel (%p494) target = $region76
        $region75: #{multi_head_self_attention.1} parent=55 // pred_region
          %498 = dma.done %s490, 4096
        $region76: #{multi_head_self_attention.1} parent=55 // pred_fallthru
          _
        %s499 = sand.u32 %s52, 1
        %s500 = scalar_lea.sflag [#allocation4], %s499
        %s501 = sand.u32 %s52, 1
        %s502 = smul.addr %s501, 256
        %s503 = scalar_lea.vmem [#allocation3], %s502
        %p504 = pneg %p65
        %p505 = pneg %p62
        %s506 = sand.u32 %s32, 1
        %s507 = scalar_lea.sflag [#allocation7], %s506
        %s508 = sand.u32 %s78, 1
        %s509 = smul.addr %s508, 256
        %s510 = scalar_lea.vmem [#allocation6], %s509
        %p511 = pneg %p91
        %p512 = pneg %p88
        %p513 = scmp.lt.s32.totalorder %s37, 1
        %s514 = scalar_select %p513, %s37, 1
        %s515 = scalar_lea.vmem %s2, %s514
        %p516 = pneg %p117
        %p517 = pneg %p114
        %s518 = sand.u32 %s32, 1
        %s519 = scalar_lea.sflag [#allocation7], %s518
        %s520 = sand.u32 %s130, 1
        %s521 = smul.addr %s520, 256
        %s522 = scalar_lea.vmem [#allocation8], %s521
        %p523 = pneg %p143
        %p524 = pneg %p140
        %p525 = scmp.lt.s32.totalorder %s37, 1
        %s526 = scalar_select %p525, %s37, 1
        %s527 = scalar_lea.vmem %s4, %s526
        %p528 = pneg %p169
        %p529 = pneg %p166
        %s530 = sand.u32 %s32, 1
        %s531 = scalar_lea.sflag [#allocation10], %s530
        %s532 = sand.u32 %s182, 1
        %s533 = smul.addr %s532, 256
        %s534 = scalar_lea.vmem [#allocation9], %s533
        %p535 = pneg %p195
        %p536 = pneg %p192
        %p537 = scmp.lt.s32.totalorder %s37, 1
        %s538 = scalar_select %p537, %s37, 1
        %s539 = scalar_lea.vmem %s6, %s538
        %p540 = pneg %p221
        %p541 = pneg %p218
        %s542 = sand.u32 %s32, 1
        %s543 = scalar_lea.sflag [#allocation10], %s542
        %s544 = sand.u32 %s234, 1
        %s545 = smul.addr %s544, 256
        %s546 = scalar_lea.vmem [#allocation11], %s545
        %p547 = pneg %p247
        %p548 = pneg %p244
        %p549 = pneg %p268
        %p550 = pneg %p265
        %p551 = pneg %p294
        %p552 = pneg %p291
        %s553 = sand.u32 %s281, 1
        %s554 = scalar_lea.sflag [#allocation5], %s553
        %s555 = sand.u32 %s281, 1
        %s556 = smul.addr %s555, 256
        %s557 = scalar_lea.vmem [#allocation12], %s556
        %p558 = scmp.lt.s32.totalorder %s37, 1
        %s559 = scalar_select %p558, %s37, 1
        %s560 = scalar_lea.vmem %s2, %s559
        %p561 = scmp.lt.s32.totalorder %s37, 1
        %s562 = scalar_select %p561, %s37, 1
        %s563 = scalar_lea.vmem %s4, %s562
        %p564 = scmp.lt.s32.totalorder %s37, 1
        %s565 = scalar_select %p564, %s37, 1
        %s566 = scalar_lea.vmem %s6, %s565
        %s567 = smul.u32 16, %s37
        %p568 = scmp.eq.s32.totalorder %s37, 0
        // Predicated region
        $region77: #{multi_head_self_attention.1} parent=55 // pred_check
          %p569 = pneg %p568
        $region78: #{multi_head_self_attention.1} parent=55 // pred_check_branch
          %571 = sbr.rel (%p569) target = $region80
        $region79: #{multi_head_self_attention.1} parent=55 // pred_region
          %572 = vst [vmem:[#allocation2] sm:$0xff] 0.0
          %573 = vst [vmem:[#allocation2 + $0x8] sm:$0xff] 0.0
          %574 = vst [vmem:[#allocation2 + $0x10] sm:$0xff] 0.0
          %575 = vst [vmem:[#allocation2 + $0x18] sm:$0xff] 0.0
          %576 = vst [vmem:[#allocation2 + $0x20] sm:$0xff] 0.0
          %577 = vst [vmem:[#allocation2 + $0x28] sm:$0xff] 0.0
          %578 = vst [vmem:[#allocation2 + $0x30] sm:$0xff] 0.0
          %579 = vst [vmem:[#allocation2 + $0x38] sm:$0xff] 0.0
          %580 = vst [vmem:[#allocation2 + $0x40] sm:$0xff] 0.0
          %581 = vst [vmem:[#allocation2 + $0x48] sm:$0xff] 0.0
          %582 = vst [vmem:[#allocation2 + $0x50] sm:$0xff] 0.0
          %583 = vst [vmem:[#allocation2 + $0x58] sm:$0xff] 0.0
          %584 = vst [vmem:[#allocation2 + $0x60] sm:$0xff] 0.0
          %585 = vst [vmem:[#allocation2 + $0x68] sm:$0xff] 0.0
          %586 = vst [vmem:[#allocation2 + $0x70] sm:$0xff] 0.0
          %587 = vst [vmem:[#allocation2 + $0x78] sm:$0xff] 0.0
          %588 = vst [vmem:[#allocation2 + $0x80] sm:$0xff] 0.0
          %589 = vst [vmem:[#allocation2 + $0x88] sm:$0xff] 0.0
          %590 = vst [vmem:[#allocation2 + $0x90] sm:$0xff] 0.0
          %591 = vst [vmem:[#allocation2 + $0x98] sm:$0xff] 0.0
          %592 = vst [vmem:[#allocation2 + $0xa0] sm:$0xff] 0.0
          %593 = vst [vmem:[#allocation2 + $0xa8] sm:$0xff] 0.0
          %594 = vst [vmem:[#allocation2 + $0xb0] sm:$0xff] 0.0
          %595 = vst [vmem:[#allocation2 + $0xb8] sm:$0xff] 0.0
          %596 = vst [vmem:[#allocation2 + $0xc0] sm:$0xff] 0.0
          %597 = vst [vmem:[#allocation2 + $0xc8] sm:$0xff] 0.0
          %598 = vst [vmem:[#allocation2 + $0xd0] sm:$0xff] 0.0
          %599 = vst [vmem:[#allocation2 + $0xd8] sm:$0xff] 0.0
          %600 = vst [vmem:[#allocation2 + $0xe0] sm:$0xff] 0.0
          %601 = vst [vmem:[#allocation2 + $0xe8] sm:$0xff] 0.0
          %602 = vst [vmem:[#allocation2 + $0xf0] sm:$0xff] 0.0
          %603 = vst [vmem:[#allocation2 + $0xf8] sm:$0xff] 0.0
        $region80: #{multi_head_self_attention.1} parent=55 // pred_fallthru
          _
        %v604 = vld [vmem:[%s453] sm:$0xff]
        %v605 = vld [vmem:[%s453 + $0x8] sm:$0xff]
        %v606 = vld [vmem:[%s453 + $0x10] sm:$0xff]
        %v607 = vld [vmem:[%s453 + $0x18] sm:$0xff]
        %v608 = vld [vmem:[%s453 + $0x20] sm:$0xff]
        %v609 = vld [vmem:[%s453 + $0x28] sm:$0xff]
        %v610 = vld [vmem:[%s453 + $0x30] sm:$0xff]
        %v611 = vld [vmem:[%s453 + $0x38] sm:$0xff]
        %v612 = vld [vmem:[%s453 + $0x40] sm:$0xff]
        %v613 = vld [vmem:[%s453 + $0x48] sm:$0xff]
        %v614 = vld [vmem:[%s453 + $0x50] sm:$0xff]
        %v615 = vld [vmem:[%s453 + $0x58] sm:$0xff]
        %v616 = vld [vmem:[%s453 + $0x60] sm:$0xff]
        %v617 = vld [vmem:[%s453 + $0x68] sm:$0xff]
        %v618 = vld [vmem:[%s453 + $0x70] sm:$0xff]
        %v619 = vld [vmem:[%s453 + $0x78] sm:$0xff]
        %v620 = vld [vmem:[%s453 + $0x80] sm:$0xff]
        %v621 = vld [vmem:[%s453 + $0x88] sm:$0xff]
        %v622 = vld [vmem:[%s453 + $0x90] sm:$0xff]
        %v623 = vld [vmem:[%s453 + $0x98] sm:$0xff]
        %v624 = vld [vmem:[%s453 + $0xa0] sm:$0xff]
        %v625 = vld [vmem:[%s453 + $0xa8] sm:$0xff]
        %v626 = vld [vmem:[%s453 + $0xb0] sm:$0xff]
        %v627 = vld [vmem:[%s453 + $0xb8] sm:$0xff]
        %v628 = vld [vmem:[%s453 + $0xc0] sm:$0xff]
        %v629 = vld [vmem:[%s453 + $0xc8] sm:$0xff]
        %v630 = vld [vmem:[%s453 + $0xd0] sm:$0xff]
        %v631 = vld [vmem:[%s453 + $0xd8] sm:$0xff]
        %v632 = vld [vmem:[%s453 + $0xe0] sm:$0xff]
        %v633 = vld [vmem:[%s453 + $0xe8] sm:$0xff]
        %v634 = vld [vmem:[%s453 + $0xf0] sm:$0xff]
        %v635 = vld [vmem:[%s453 + $0xf8] sm:$0xff]
        %v636 = vld [vmem:[%s463] sm:$0xff]
        %v637 = vld [vmem:[%s463 + $0x8] sm:$0xff]
        %v638 = vld [vmem:[%s463 + $0x10] sm:$0xff]
        %v639 = vld [vmem:[%s463 + $0x18] sm:$0xff]
        %v640 = vld [vmem:[%s463 + $0x20] sm:$0xff]
        %v641 = vld [vmem:[%s463 + $0x28] sm:$0xff]
        %v642 = vld [vmem:[%s463 + $0x30] sm:$0xff]
        %v643 = vld [vmem:[%s463 + $0x38] sm:$0xff]
        %v644 = vld [vmem:[%s463 + $0x40] sm:$0xff]
        %v645 = vld [vmem:[%s463 + $0x48] sm:$0xff]
        %v646 = vld [vmem:[%s463 + $0x50] sm:$0xff]
        %v647 = vld [vmem:[%s463 + $0x58] sm:$0xff]
        %v648 = vld [vmem:[%s463 + $0x60] sm:$0xff]
        %v649 = vld [vmem:[%s463 + $0x68] sm:$0xff]
        %v650 = vld [vmem:[%s463 + $0x70] sm:$0xff]
        %v651 = vld [vmem:[%s463 + $0x78] sm:$0xff]
        %v652 = vld [vmem:[%s463 + $0x80] sm:$0xff]
        %v653 = vld [vmem:[%s463 + $0x88] sm:$0xff]
        %v654 = vld [vmem:[%s463 + $0x90] sm:$0xff]
        %v655 = vld [vmem:[%s463 + $0x98] sm:$0xff]
        %v656 = vld [vmem:[%s463 + $0xa0] sm:$0xff]
        %v657 = vld [vmem:[%s463 + $0xa8] sm:$0xff]
        %v658 = vld [vmem:[%s463 + $0xb0] sm:$0xff]
        %v659 = vld [vmem:[%s463 + $0xb8] sm:$0xff]
        %v660 = vld [vmem:[%s463 + $0xc0] sm:$0xff]
        %v661 = vld [vmem:[%s463 + $0xc8] sm:$0xff]
        %v662 = vld [vmem:[%s463 + $0xd0] sm:$0xff]
        %v663 = vld [vmem:[%s463 + $0xd8] sm:$0xff]
        %v664 = vld [vmem:[%s463 + $0xe0] sm:$0xff]
        %v665 = vld [vmem:[%s463 + $0xe8] sm:$0xff]
        %v666 = vld [vmem:[%s463 + $0xf0] sm:$0xff]
        %v667 = vld [vmem:[%s463 + $0xf8] sm:$0xff]
        %v668 = vld [vmem:[%s560] sm:$0x1]
        %v670 = vperm.slane %v668, 0
        %672 = vmatpush.msra.mxu0 %v651
        %673 = vmatpush.msra.mxu0 %v650
        %674 = vmatpush.msra.mxu0 %v649
        %675 = vmatpush.msra.mxu0 %v648
        %676 = vmatpush.msra.mxu0 %v647
        %677 = vmatpush.msra.mxu0 %v646
        %678 = vmatpush.msra.mxu0 %v645
        %679 = vmatpush.msra.mxu0 %v644
        %680 = vmatpush.msra.mxu0 %v643
        %681 = vmatpush.msra.mxu0 %v642
        %682 = vmatpush.msra.mxu0 %v641
        %683 = vmatpush.msra.mxu0 %v640
        %684 = vmatpush.msra.mxu0 %v639
        %685 = vmatpush.msra.mxu0 %v638
        %686 = vmatpush.msra.mxu0 %v637
        %687 = vmatpush.msra.mxu0 %v636
        %688 = vmatmul.f32.gmra.mxu0 %v604
        %v689 = vpop.f32.mrf.mxu0
        %v690 = vadd.f32 %v670, %v689
        %691 = vmatmul.f32.gmra.mxu0 %v606
        %v692 = vpop.f32.mrf.mxu0
        %v693 = vadd.f32 %v670, %v692
        %694 = vmatmul.f32.gmra.mxu0 %v608
        %v695 = vpop.f32.mrf.mxu0
        %v696 = vadd.f32 %v670, %v695
        %697 = vmatmul.f32.gmra.mxu0 %v610
        %v698 = vpop.f32.mrf.mxu0
        %v699 = vadd.f32 %v670, %v698
        %700 = vmatmul.f32.gmra.mxu0 %v612
        %v701 = vpop.f32.mrf.mxu0
        %v702 = vadd.f32 %v670, %v701
        %703 = vmatmul.f32.gmra.mxu0 %v614
        %v704 = vpop.f32.mrf.mxu0
        %v705 = vadd.f32 %v670, %v704
        %706 = vmatmul.f32.gmra.mxu0 %v616
        %v707 = vpop.f32.mrf.mxu0
        %v708 = vadd.f32 %v670, %v707
        %709 = vmatmul.f32.gmra.mxu0 %v618
        %v710 = vpop.f32.mrf.mxu0
        %v711 = vadd.f32 %v670, %v710
        %712 = vmatmul.f32.gmra.mxu0 %v620
        %v713 = vpop.f32.mrf.mxu0
        %v714 = vadd.f32 %v670, %v713
        %715 = vmatmul.f32.gmra.mxu0 %v622
        %v716 = vpop.f32.mrf.mxu0
        %v717 = vadd.f32 %v670, %v716
        %718 = vmatmul.f32.gmra.mxu0 %v624
        %v719 = vpop.f32.mrf.mxu0
        %v720 = vadd.f32 %v670, %v719
        %721 = vmatmul.f32.gmra.mxu0 %v626
        %v722 = vpop.f32.mrf.mxu0
        %v723 = vadd.f32 %v670, %v722
        %724 = vmatmul.f32.gmra.mxu0 %v628
        %v725 = vpop.f32.mrf.mxu0
        %v726 = vadd.f32 %v670, %v725
        %727 = vmatmul.f32.gmra.mxu0 %v630
        %v728 = vpop.f32.mrf.mxu0
        %v729 = vadd.f32 %v670, %v728
        %730 = vmatmul.f32.gmra.mxu0 %v632
        %v731 = vpop.f32.mrf.mxu0
        %v732 = vadd.f32 %v670, %v731
        %733 = vmatmul.f32.gmra.mxu0 %v634
        %v734 = vpop.f32.mrf.mxu0
        %v735 = vadd.f32 %v670, %v734
        %736 = vdwg.mxu0
        %737 = vmatpush.msra.mxu0 %v667
        %738 = vmatpush.msra.mxu0 %v666
        %739 = vmatpush.msra.mxu0 %v665
        %740 = vmatpush.msra.mxu0 %v664
        %741 = vmatpush.msra.mxu0 %v663
        %742 = vmatpush.msra.mxu0 %v662
        %743 = vmatpush.msra.mxu0 %v661
        %744 = vmatpush.msra.mxu0 %v660
        %745 = vmatpush.msra.mxu0 %v659
        %746 = vmatpush.msra.mxu0 %v658
        %747 = vmatpush.msra.mxu0 %v657
        %748 = vmatpush.msra.mxu0 %v656
        %749 = vmatpush.msra.mxu0 %v655
        %750 = vmatpush.msra.mxu0 %v654
        %751 = vmatpush.msra.mxu0 %v653
        %752 = vmatpush.msra.mxu0 %v652
        %753 = vmatmul.f32.gmra.mxu0 %v605
        %v754 = vpop.f32.mrf.mxu0
        %v755 = vadd.f32 %v690, %v754
        %756 = vmatmul.f32.gmra.mxu0 %v607
        %v757 = vpop.f32.mrf.mxu0
        %v758 = vadd.f32 %v693, %v757
        %759 = vmatmul.f32.gmra.mxu0 %v609
        %v760 = vpop.f32.mrf.mxu0
        %v761 = vadd.f32 %v696, %v760
        %762 = vmatmul.f32.gmra.mxu0 %v611
        %v763 = vpop.f32.mrf.mxu0
        %v764 = vadd.f32 %v699, %v763
        %765 = vmatmul.f32.gmra.mxu0 %v613
        %v766 = vpop.f32.mrf.mxu0
        %v767 = vadd.f32 %v702, %v766
        %768 = vmatmul.f32.gmra.mxu0 %v615
        %v769 = vpop.f32.mrf.mxu0
        %v770 = vadd.f32 %v705, %v769
        %771 = vmatmul.f32.gmra.mxu0 %v617
        %v772 = vpop.f32.mrf.mxu0
        %v773 = vadd.f32 %v708, %v772
        %774 = vmatmul.f32.gmra.mxu0 %v619
        %v775 = vpop.f32.mrf.mxu0
        %v776 = vadd.f32 %v711, %v775
        %777 = vmatmul.f32.gmra.mxu0 %v621
        %v778 = vpop.f32.mrf.mxu0
        %v779 = vadd.f32 %v714, %v778
        %780 = vmatmul.f32.gmra.mxu0 %v623
        %v781 = vpop.f32.mrf.mxu0
        %v782 = vadd.f32 %v717, %v781
        %783 = vmatmul.f32.gmra.mxu0 %v625
        %v784 = vpop.f32.mrf.mxu0
        %v785 = vadd.f32 %v720, %v784
        %786 = vmatmul.f32.gmra.mxu0 %v627
        %v787 = vpop.f32.mrf.mxu0
        %v788 = vadd.f32 %v723, %v787
        %789 = vmatmul.f32.gmra.mxu0 %v629
        %v790 = vpop.f32.mrf.mxu0
        %v791 = vadd.f32 %v726, %v790
        %792 = vmatmul.f32.gmra.mxu0 %v631
        %v793 = vpop.f32.mrf.mxu0
        %v794 = vadd.f32 %v729, %v793
        %795 = vmatmul.f32.gmra.mxu0 %v633
        %v796 = vpop.f32.mrf.mxu0
        %v797 = vadd.f32 %v732, %v796
        %798 = vmatmul.f32.gmra.mxu0 %v635
        %v799 = vpop.f32.mrf.mxu0
        %v800 = vadd.f32 %v735, %v799
        %801 = vdwg.mxu0
        %v802 = vld [vmem:[%s473] sm:$0xff]
        %v803 = vld [vmem:[%s473 + $0x8] sm:$0xff]
        %v804 = vld [vmem:[%s473 + $0x10] sm:$0xff]
        %v805 = vld [vmem:[%s473 + $0x18] sm:$0xff]
        %v806 = vld [vmem:[%s473 + $0x20] sm:$0xff]
        %v807 = vld [vmem:[%s473 + $0x28] sm:$0xff]
        %v808 = vld [vmem:[%s473 + $0x30] sm:$0xff]
        %v809 = vld [vmem:[%s473 + $0x38] sm:$0xff]
        %v810 = vld [vmem:[%s473 + $0x40] sm:$0xff]
        %v811 = vld [vmem:[%s473 + $0x48] sm:$0xff]
        %v812 = vld [vmem:[%s473 + $0x50] sm:$0xff]
        %v813 = vld [vmem:[%s473 + $0x58] sm:$0xff]
        %v814 = vld [vmem:[%s473 + $0x60] sm:$0xff]
        %v815 = vld [vmem:[%s473 + $0x68] sm:$0xff]
        %v816 = vld [vmem:[%s473 + $0x70] sm:$0xff]
        %v817 = vld [vmem:[%s473 + $0x78] sm:$0xff]
        %v818 = vld [vmem:[%s473 + $0x80] sm:$0xff]
        %v819 = vld [vmem:[%s473 + $0x88] sm:$0xff]
        %v820 = vld [vmem:[%s473 + $0x90] sm:$0xff]
        %v821 = vld [vmem:[%s473 + $0x98] sm:$0xff]
        %v822 = vld [vmem:[%s473 + $0xa0] sm:$0xff]
        %v823 = vld [vmem:[%s473 + $0xa8] sm:$0xff]
        %v824 = vld [vmem:[%s473 + $0xb0] sm:$0xff]
        %v825 = vld [vmem:[%s473 + $0xb8] sm:$0xff]
        %v826 = vld [vmem:[%s473 + $0xc0] sm:$0xff]
        %v827 = vld [vmem:[%s473 + $0xc8] sm:$0xff]
        %v828 = vld [vmem:[%s473 + $0xd0] sm:$0xff]
        %v829 = vld [vmem:[%s473 + $0xd8] sm:$0xff]
        %v830 = vld [vmem:[%s473 + $0xe0] sm:$0xff]
        %v831 = vld [vmem:[%s473 + $0xe8] sm:$0xff]
        %v832 = vld [vmem:[%s473 + $0xf0] sm:$0xff]
        %v833 = vld [vmem:[%s473 + $0xf8] sm:$0xff]
        %v834 = vld [vmem:[%s563] sm:$0x1]
        %v836 = vperm.slane %v834, 0
        %838 = vmatpush.msra.mxu0 %v817
        %839 = vmatpush.msra.mxu0 %v816
        %840 = vmatpush.msra.mxu0 %v815
        %841 = vmatpush.msra.mxu0 %v814
        %842 = vmatpush.msra.mxu0 %v813
        %843 = vmatpush.msra.mxu0 %v812
        %844 = vmatpush.msra.mxu0 %v811
        %845 = vmatpush.msra.mxu0 %v810
        %846 = vmatpush.msra.mxu0 %v809
        %847 = vmatpush.msra.mxu0 %v808
        %848 = vmatpush.msra.mxu0 %v807
        %849 = vmatpush.msra.mxu0 %v806
        %850 = vmatpush.msra.mxu0 %v805
        %851 = vmatpush.msra.mxu0 %v804
        %852 = vmatpush.msra.mxu0 %v803
        %853 = vmatpush.msra.mxu0 %v802
        %854 = vmatmul.f32.gmra.mxu0 %v604
        %v855 = vpop.f32.mrf.mxu0
        %v856 = vadd.f32 %v836, %v855
        %857 = vmatmul.f32.gmra.mxu0 %v606
        %v858 = vpop.f32.mrf.mxu0
        %v859 = vadd.f32 %v836, %v858
        %860 = vmatmul.f32.gmra.mxu0 %v608
        %v861 = vpop.f32.mrf.mxu0
        %v862 = vadd.f32 %v836, %v861
        %863 = vmatmul.f32.gmra.mxu0 %v610
        %v864 = vpop.f32.mrf.mxu0
        %v865 = vadd.f32 %v836, %v864
        %866 = vmatmul.f32.gmra.mxu0 %v612
        %v867 = vpop.f32.mrf.mxu0
        %v868 = vadd.f32 %v836, %v867
        %869 = vmatmul.f32.gmra.mxu0 %v614
        %v870 = vpop.f32.mrf.mxu0
        %v871 = vadd.f32 %v836, %v870
        %872 = vmatmul.f32.gmra.mxu0 %v616
        %v873 = vpop.f32.mrf.mxu0
        %v874 = vadd.f32 %v836, %v873
        %875 = vmatmul.f32.gmra.mxu0 %v618
        %v876 = vpop.f32.mrf.mxu0
        %v877 = vadd.f32 %v836, %v876
        %878 = vmatmul.f32.gmra.mxu0 %v620
        %v879 = vpop.f32.mrf.mxu0
        %v880 = vadd.f32 %v836, %v879
        %881 = vmatmul.f32.gmra.mxu0 %v622
        %v882 = vpop.f32.mrf.mxu0
        %v883 = vadd.f32 %v836, %v882
        %884 = vmatmul.f32.gmra.mxu0 %v624
        %v885 = vpop.f32.mrf.mxu0
        %v886 = vadd.f32 %v836, %v885
        %887 = vmatmul.f32.gmra.mxu0 %v626
        %v888 = vpop.f32.mrf.mxu0
        %v889 = vadd.f32 %v836, %v888
        %890 = vmatmul.f32.gmra.mxu0 %v628
        %v891 = vpop.f32.mrf.mxu0
        %v892 = vadd.f32 %v836, %v891
        %893 = vmatmul.f32.gmra.mxu0 %v630
        %v894 = vpop.f32.mrf.mxu0
        %v895 = vadd.f32 %v836, %v894
        %896 = vmatmul.f32.gmra.mxu0 %v632
        %v897 = vpop.f32.mrf.mxu0
        %v898 = vadd.f32 %v836, %v897
        %899 = vmatmul.f32.gmra.mxu0 %v634
        %v900 = vpop.f32.mrf.mxu0
        %v901 = vadd.f32 %v836, %v900
        %902 = vdwg.mxu0
        %903 = vmatpush.msra.mxu0 %v833
        %904 = vmatpush.msra.mxu0 %v832
        %905 = vmatpush.msra.mxu0 %v831
        %906 = vmatpush.msra.mxu0 %v830
        %907 = vmatpush.msra.mxu0 %v829
        %908 = vmatpush.msra.mxu0 %v828
        %909 = vmatpush.msra.mxu0 %v827
        %910 = vmatpush.msra.mxu0 %v826
        %911 = vmatpush.msra.mxu0 %v825
        %912 = vmatpush.msra.mxu0 %v824
        %913 = vmatpush.msra.mxu0 %v823
        %914 = vmatpush.msra.mxu0 %v822
        %915 = vmatpush.msra.mxu0 %v821
        %916 = vmatpush.msra.mxu0 %v820
        %917 = vmatpush.msra.mxu0 %v819
        %918 = vmatpush.msra.mxu0 %v818
        %919 = vmatmul.f32.gmra.mxu0 %v605
        %v920 = vpop.f32.mrf.mxu0
        %v921 = vadd.f32 %v856, %v920
        %922 = vmatmul.f32.gmra.mxu0 %v607
        %v923 = vpop.f32.mrf.mxu0
        %v924 = vadd.f32 %v859, %v923
        %925 = vmatmul.f32.gmra.mxu0 %v609
        %v926 = vpop.f32.mrf.mxu0
        %v927 = vadd.f32 %v862, %v926
        %928 = vmatmul.f32.gmra.mxu0 %v611
        %v929 = vpop.f32.mrf.mxu0
        %v930 = vadd.f32 %v865, %v929
        %931 = vmatmul.f32.gmra.mxu0 %v613
        %v932 = vpop.f32.mrf.mxu0
        %v933 = vadd.f32 %v868, %v932
        %934 = vmatmul.f32.gmra.mxu0 %v615
        %v935 = vpop.f32.mrf.mxu0
        %v936 = vadd.f32 %v871, %v935
        %937 = vmatmul.f32.gmra.mxu0 %v617
        %v938 = vpop.f32.mrf.mxu0
        %v939 = vadd.f32 %v874, %v938
        %940 = vmatmul.f32.gmra.mxu0 %v619
        %v941 = vpop.f32.mrf.mxu0
        %v942 = vadd.f32 %v877, %v941
        %943 = vmatmul.f32.gmra.mxu0 %v621
        %v944 = vpop.f32.mrf.mxu0
        %v945 = vadd.f32 %v880, %v944
        %946 = vmatmul.f32.gmra.mxu0 %v623
        %v947 = vpop.f32.mrf.mxu0
        %v948 = vadd.f32 %v883, %v947
        %949 = vmatmul.f32.gmra.mxu0 %v625
        %v950 = vpop.f32.mrf.mxu0
        %v951 = vadd.f32 %v886, %v950
        %952 = vmatmul.f32.gmra.mxu0 %v627
        %v953 = vpop.f32.mrf.mxu0
        %v954 = vadd.f32 %v889, %v953
        %955 = vmatmul.f32.gmra.mxu0 %v629
        %v956 = vpop.f32.mrf.mxu0
        %v957 = vadd.f32 %v892, %v956
        %958 = vmatmul.f32.gmra.mxu0 %v631
        %v959 = vpop.f32.mrf.mxu0
        %v960 = vadd.f32 %v895, %v959
        %961 = vmatmul.f32.gmra.mxu0 %v633
        %v962 = vpop.f32.mrf.mxu0
        %v963 = vadd.f32 %v898, %v962
        %964 = vmatmul.f32.gmra.mxu0 %v635
        %v965 = vpop.f32.mrf.mxu0
        %v966 = vadd.f32 %v901, %v965
        %967 = vdwg.mxu0
        %v968 = vld [vmem:[%s483] sm:$0xff]
        %v969 = vld [vmem:[%s483 + $0x8] sm:$0xff]
        %v970 = vld [vmem:[%s483 + $0x10] sm:$0xff]
        %v971 = vld [vmem:[%s483 + $0x18] sm:$0xff]
        %v972 = vld [vmem:[%s483 + $0x20] sm:$0xff]
        %v973 = vld [vmem:[%s483 + $0x28] sm:$0xff]
        %v974 = vld [vmem:[%s483 + $0x30] sm:$0xff]
        %v975 = vld [vmem:[%s483 + $0x38] sm:$0xff]
        %v976 = vld [vmem:[%s483 + $0x40] sm:$0xff]
        %v977 = vld [vmem:[%s483 + $0x48] sm:$0xff]
        %v978 = vld [vmem:[%s483 + $0x50] sm:$0xff]
        %v979 = vld [vmem:[%s483 + $0x58] sm:$0xff]
        %v980 = vld [vmem:[%s483 + $0x60] sm:$0xff]
        %v981 = vld [vmem:[%s483 + $0x68] sm:$0xff]
        %v982 = vld [vmem:[%s483 + $0x70] sm:$0xff]
        %v983 = vld [vmem:[%s483 + $0x78] sm:$0xff]
        %v984 = vld [vmem:[%s483 + $0x80] sm:$0xff]
        %v985 = vld [vmem:[%s483 + $0x88] sm:$0xff]
        %v986 = vld [vmem:[%s483 + $0x90] sm:$0xff]
        %v987 = vld [vmem:[%s483 + $0x98] sm:$0xff]
        %v988 = vld [vmem:[%s483 + $0xa0] sm:$0xff]
        %v989 = vld [vmem:[%s483 + $0xa8] sm:$0xff]
        %v990 = vld [vmem:[%s483 + $0xb0] sm:$0xff]
        %v991 = vld [vmem:[%s483 + $0xb8] sm:$0xff]
        %v992 = vld [vmem:[%s483 + $0xc0] sm:$0xff]
        %v993 = vld [vmem:[%s483 + $0xc8] sm:$0xff]
        %v994 = vld [vmem:[%s483 + $0xd0] sm:$0xff]
        %v995 = vld [vmem:[%s483 + $0xd8] sm:$0xff]
        %v996 = vld [vmem:[%s483 + $0xe0] sm:$0xff]
        %v997 = vld [vmem:[%s483 + $0xe8] sm:$0xff]
        %v998 = vld [vmem:[%s483 + $0xf0] sm:$0xff]
        %v999 = vld [vmem:[%s483 + $0xf8] sm:$0xff]
        %v1000 = vld [vmem:[%s566] sm:$0x1]
        %v1002 = vperm.slane %v1000, 0
        %1004 = vmatpush.msra.mxu0 %v983
        %1005 = vmatpush.msra.mxu0 %v982
        %1006 = vmatpush.msra.mxu0 %v981
        %1007 = vmatpush.msra.mxu0 %v980
        %1008 = vmatpush.msra.mxu0 %v979
        %1009 = vmatpush.msra.mxu0 %v978
        %1010 = vmatpush.msra.mxu0 %v977
        %1011 = vmatpush.msra.mxu0 %v976
        %1012 = vmatpush.msra.mxu0 %v975
        %1013 = vmatpush.msra.mxu0 %v974
        %1014 = vmatpush.msra.mxu0 %v973
        %1015 = vmatpush.msra.mxu0 %v972
        %1016 = vmatpush.msra.mxu0 %v971
        %1017 = vmatpush.msra.mxu0 %v970
        %1018 = vmatpush.msra.mxu0 %v969
        %1019 = vmatpush.msra.mxu0 %v968
        %1020 = vmatmul.f32.gmra.mxu0 %v604
        %v1021 = vpop.f32.mrf.mxu0
        %v1022 = vadd.f32 %v1002, %v1021
        %1023 = vmatmul.f32.gmra.mxu0 %v606
        %v1024 = vpop.f32.mrf.mxu0
        %v1025 = vadd.f32 %v1002, %v1024
        %1026 = vmatmul.f32.gmra.mxu0 %v608
        %v1027 = vpop.f32.mrf.mxu0
        %v1028 = vadd.f32 %v1002, %v1027
        %1029 = vmatmul.f32.gmra.mxu0 %v610
        %v1030 = vpop.f32.mrf.mxu0
        %v1031 = vadd.f32 %v1002, %v1030
        %1032 = vmatmul.f32.gmra.mxu0 %v612
        %v1033 = vpop.f32.mrf.mxu0
        %v1034 = vadd.f32 %v1002, %v1033
        %1035 = vmatmul.f32.gmra.mxu0 %v614
        %v1036 = vpop.f32.mrf.mxu0
        %v1037 = vadd.f32 %v1002, %v1036
        %1038 = vmatmul.f32.gmra.mxu0 %v616
        %v1039 = vpop.f32.mrf.mxu0
        %v1040 = vadd.f32 %v1002, %v1039
        %1041 = vmatmul.f32.gmra.mxu0 %v618
        %v1042 = vpop.f32.mrf.mxu0
        %v1043 = vadd.f32 %v1002, %v1042
        %1044 = vmatmul.f32.gmra.mxu0 %v620
        %v1045 = vpop.f32.mrf.mxu0
        %v1046 = vadd.f32 %v1002, %v1045
        %1047 = vmatmul.f32.gmra.mxu0 %v622
        %v1048 = vpop.f32.mrf.mxu0
        %v1049 = vadd.f32 %v1002, %v1048
        %1050 = vmatmul.f32.gmra.mxu0 %v624
        %v1051 = vpop.f32.mrf.mxu0
        %v1052 = vadd.f32 %v1002, %v1051
        %1053 = vmatmul.f32.gmra.mxu0 %v626
        %v1054 = vpop.f32.mrf.mxu0
        %v1055 = vadd.f32 %v1002, %v1054
        %1056 = vmatmul.f32.gmra.mxu0 %v628
        %v1057 = vpop.f32.mrf.mxu0
        %v1058 = vadd.f32 %v1002, %v1057
        %1059 = vmatmul.f32.gmra.mxu0 %v630
        %v1060 = vpop.f32.mrf.mxu0
        %v1061 = vadd.f32 %v1002, %v1060
        %1062 = vmatmul.f32.gmra.mxu0 %v632
        %v1063 = vpop.f32.mrf.mxu0
        %v1064 = vadd.f32 %v1002, %v1063
        %1065 = vmatmul.f32.gmra.mxu0 %v634
        %v1066 = vpop.f32.mrf.mxu0
        %v1067 = vadd.f32 %v1002, %v1066
        %1068 = vdwg.mxu0
        %1069 = vmatpush.msra.mxu0 %v999
        %1070 = vmatpush.msra.mxu0 %v998
        %1071 = vmatpush.msra.mxu0 %v997
        %1072 = vmatpush.msra.mxu0 %v996
        %1073 = vmatpush.msra.mxu0 %v995
        %1074 = vmatpush.msra.mxu0 %v994
        %1075 = vmatpush.msra.mxu0 %v993
        %1076 = vmatpush.msra.mxu0 %v992
        %1077 = vmatpush.msra.mxu0 %v991
        %1078 = vmatpush.msra.mxu0 %v990
        %1079 = vmatpush.msra.mxu0 %v989
        %1080 = vmatpush.msra.mxu0 %v988
        %1081 = vmatpush.msra.mxu0 %v987
        %1082 = vmatpush.msra.mxu0 %v986
        %1083 = vmatpush.msra.mxu0 %v985
        %1084 = vmatpush.msra.mxu0 %v984
        %1085 = vmatmul.f32.gmra.mxu0 %v605
        %v1086 = vpop.f32.mrf.mxu0
        %v1087 = vadd.f32 %v1022, %v1086
        %1088 = vmatmul.f32.gmra.mxu0 %v607
        %v1089 = vpop.f32.mrf.mxu0
        %v1090 = vadd.f32 %v1025, %v1089
        %1091 = vmatmul.f32.gmra.mxu0 %v609
        %v1092 = vpop.f32.mrf.mxu0
        %v1093 = vadd.f32 %v1028, %v1092
        %1094 = vmatmul.f32.gmra.mxu0 %v611
        %v1095 = vpop.f32.mrf.mxu0
        %v1096 = vadd.f32 %v1031, %v1095
        %1097 = vmatmul.f32.gmra.mxu0 %v613
        %v1098 = vpop.f32.mrf.mxu0
        %v1099 = vadd.f32 %v1034, %v1098
        %1100 = vmatmul.f32.gmra.mxu0 %v615
        %v1101 = vpop.f32.mrf.mxu0
        %v1102 = vadd.f32 %v1037, %v1101
        %1103 = vmatmul.f32.gmra.mxu0 %v617
        %v1104 = vpop.f32.mrf.mxu0
        %v1105 = vadd.f32 %v1040, %v1104
        %1106 = vmatmul.f32.gmra.mxu0 %v619
        %v1107 = vpop.f32.mrf.mxu0
        %v1108 = vadd.f32 %v1043, %v1107
        %1109 = vmatmul.f32.gmra.mxu0 %v621
        %v1110 = vpop.f32.mrf.mxu0
        %v1111 = vadd.f32 %v1046, %v1110
        %1112 = vmatmul.f32.gmra.mxu0 %v623
        %v1113 = vpop.f32.mrf.mxu0
        %v1114 = vadd.f32 %v1049, %v1113
        %1115 = vmatmul.f32.gmra.mxu0 %v625
        %v1116 = vpop.f32.mrf.mxu0
        %v1117 = vadd.f32 %v1052, %v1116
        %1118 = vmatmul.f32.gmra.mxu0 %v627
        %v1119 = vpop.f32.mrf.mxu0
        %v1120 = vadd.f32 %v1055, %v1119
        %1121 = vmatmul.f32.gmra.mxu0 %v629
        %v1122 = vpop.f32.mrf.mxu0
        %v1123 = vadd.f32 %v1058, %v1122
        %1124 = vmatmul.f32.gmra.mxu0 %v631
        %v1125 = vpop.f32.mrf.mxu0
        %v1126 = vadd.f32 %v1061, %v1125
        %1127 = vmatmul.f32.gmra.mxu0 %v633
        %v1128 = vpop.f32.mrf.mxu0
        %v1129 = vadd.f32 %v1064, %v1128
        %1130 = vmatmul.f32.gmra.mxu0 %v635
        %v1131 = vpop.f32.mrf.mxu0
        %v1132 = vadd.f32 %v1067, %v1131
        %1133 = vdwg.mxu0
        %v1134 = vmul.f32 %v755, 0.088388346
        %v1135 = vmul.f32 %v758, 0.088388346
        %v1136 = vmul.f32 %v761, 0.088388346
        %v1137 = vmul.f32 %v764, 0.088388346
        %v1138 = vmul.f32 %v767, 0.088388346
        %v1139 = vmul.f32 %v770, 0.088388346
        %v1140 = vmul.f32 %v773, 0.088388346
        %v1141 = vmul.f32 %v776, 0.088388346
        %v1142 = vmul.f32 %v779, 0.088388346
        %v1143 = vmul.f32 %v782, 0.088388346
        %v1144 = vmul.f32 %v785, 0.088388346
        %v1145 = vmul.f32 %v788, 0.088388346
        %v1146 = vmul.f32 %v791, 0.088388346
        %v1147 = vmul.f32 %v794, 0.088388346
        %v1148 = vmul.f32 %v797, 0.088388346
        %v1149 = vmul.f32 %v800, 0.088388346
        %1150 = vmatpush.xpose.msra.mxu0 %v966
        %1151 = vmatpush.xpose.msra.mxu0 %v963
        %1152 = vmatpush.xpose.msra.mxu0 %v960
        %1153 = vmatpush.xpose.msra.mxu0 %v957
        %1154 = vmatpush.xpose.msra.mxu0 %v954
        %1155 = vmatpush.xpose.msra.mxu0 %v951
        %1156 = vmatpush.xpose.msra.mxu0 %v948
        %1157 = vmatpush.xpose.msra.mxu0 %v945
        %1158 = vmatpush.xpose.msra.mxu0 %v942
        %1159 = vmatpush.xpose.msra.mxu0 %v939
        %1160 = vmatpush.xpose.msra.mxu0 %v936
        %1161 = vmatpush.xpose.msra.mxu0 %v933
        %1162 = vmatpush.xpose.msra.mxu0 %v930
        %1163 = vmatpush.xpose.msra.mxu0 %v927
        %1164 = vmatpush.xpose.msra.mxu0 %v924
        %1165 = vmatpush.xpose.msra.mxu0 %v921
        %1166 = vmatmul.f32.gmra.mxu0 %v1134
        %v1167 = vpop.f32.mrf.mxu0
        %v1168 = vadd.f32 0.0, %v1167
        %1169 = vmatmul.f32.gmra.mxu0 %v1135
        %v1170 = vpop.f32.mrf.mxu0
        %v1171 = vadd.f32 0.0, %v1170
        %1172 = vmatmul.f32.gmra.mxu0 %v1136
        %v1173 = vpop.f32.mrf.mxu0
        %v1174 = vadd.f32 0.0, %v1173
        %1175 = vmatmul.f32.gmra.mxu0 %v1137
        %v1176 = vpop.f32.mrf.mxu0
        %v1177 = vadd.f32 0.0, %v1176
        %1178 = vmatmul.f32.gmra.mxu0 %v1138
        %v1179 = vpop.f32.mrf.mxu0
        %v1180 = vadd.f32 0.0, %v1179
        %1181 = vmatmul.f32.gmra.mxu0 %v1139
        %v1182 = vpop.f32.mrf.mxu0
        %v1183 = vadd.f32 0.0, %v1182
        %1184 = vmatmul.f32.gmra.mxu0 %v1140
        %v1185 = vpop.f32.mrf.mxu0
        %v1186 = vadd.f32 0.0, %v1185
        %1187 = vmatmul.f32.gmra.mxu0 %v1141
        %v1188 = vpop.f32.mrf.mxu0
        %v1189 = vadd.f32 0.0, %v1188
        %1190 = vmatmul.f32.gmra.mxu0 %v1142
        %v1191 = vpop.f32.mrf.mxu0
        %v1192 = vadd.f32 0.0, %v1191
        %1193 = vmatmul.f32.gmra.mxu0 %v1143
        %v1194 = vpop.f32.mrf.mxu0
        %v1195 = vadd.f32 0.0, %v1194
        %1196 = vmatmul.f32.gmra.mxu0 %v1144
        %v1197 = vpop.f32.mrf.mxu0
        %v1198 = vadd.f32 0.0, %v1197
        %1199 = vmatmul.f32.gmra.mxu0 %v1145
        %v1200 = vpop.f32.mrf.mxu0
        %v1201 = vadd.f32 0.0, %v1200
        %1202 = vmatmul.f32.gmra.mxu0 %v1146
        %v1203 = vpop.f32.mrf.mxu0
        %v1204 = vadd.f32 0.0, %v1203
        %1205 = vmatmul.f32.gmra.mxu0 %v1147
        %v1206 = vpop.f32.mrf.mxu0
        %v1207 = vadd.f32 0.0, %v1206
        %1208 = vmatmul.f32.gmra.mxu0 %v1148
        %v1209 = vpop.f32.mrf.mxu0
        %v1210 = vadd.f32 0.0, %v1209
        %1211 = vmatmul.f32.gmra.mxu0 %v1149
        %v1212 = vpop.f32.mrf.mxu0
        %v1213 = vadd.f32 0.0, %v1212
        %1214 = vdwg.mxu0
        %1215 = vmax.xlane.f32.xlu0 %v1168
        %v1216 = vpop.xlane.xlu0 %1215
        %1217 = vmax.xlane.f32.xlu0 %v1171
        %v1218 = vpop.xlane.xlu0 %1217
        %1219 = vmax.xlane.f32.xlu0 %v1174
        %v1220 = vpop.xlane.xlu0 %1219
        %1221 = vmax.xlane.f32.xlu0 %v1177
        %v1222 = vpop.xlane.xlu0 %1221
        %1223 = vmax.xlane.f32.xlu0 %v1180
        %v1224 = vpop.xlane.xlu0 %1223
        %1225 = vmax.xlane.f32.xlu0 %v1183
        %v1226 = vpop.xlane.xlu0 %1225
        %1227 = vmax.xlane.f32.xlu0 %v1186
        %v1228 = vpop.xlane.xlu0 %1227
        %1229 = vmax.xlane.f32.xlu0 %v1189
        %v1230 = vpop.xlane.xlu0 %1229
        %1231 = vmax.xlane.f32.xlu0 %v1192
        %v1232 = vpop.xlane.xlu0 %1231
        %1233 = vmax.xlane.f32.xlu0 %v1195
        %v1234 = vpop.xlane.xlu0 %1233
        %1235 = vmax.xlane.f32.xlu0 %v1198
        %v1236 = vpop.xlane.xlu0 %1235
        %1237 = vmax.xlane.f32.xlu0 %v1201
        %v1238 = vpop.xlane.xlu0 %1237
        %1239 = vmax.xlane.f32.xlu0 %v1204
        %v1240 = vpop.xlane.xlu0 %1239
        %1241 = vmax.xlane.f32.xlu0 %v1207
        %v1242 = vpop.xlane.xlu0 %1241
        %1243 = vmax.xlane.f32.xlu0 %v1210
        %v1244 = vpop.xlane.xlu0 %1243
        %1245 = vmax.xlane.f32.xlu0 %v1213
        %v1246 = vpop.xlane.xlu0 %1245
        %v1247 = vsub.f32 %v1168, %v1216
        %v1248 = vsub.f32 %v1171, %v1218
        %v1249 = vsub.f32 %v1174, %v1220
        %v1250 = vsub.f32 %v1177, %v1222
        %v1251 = vsub.f32 %v1180, %v1224
        %v1252 = vsub.f32 %v1183, %v1226
        %v1253 = vsub.f32 %v1186, %v1228
        %v1254 = vsub.f32 %v1189, %v1230
        %v1255 = vsub.f32 %v1192, %v1232
        %v1256 = vsub.f32 %v1195, %v1234
        %v1257 = vsub.f32 %v1198, %v1236
        %v1258 = vsub.f32 %v1201, %v1238
        %v1259 = vsub.f32 %v1204, %v1240
        %v1260 = vsub.f32 %v1207, %v1242
        %v1261 = vsub.f32 %v1210, %v1244
        %v1262 = vsub.f32 %v1213, %v1246
        %v1263 = vmul.f32 %v1247, 1.442695
        %v1264 = vpow.pop %v1263
        %v1265 = vmul.f32 %v1248, 1.442695
        %v1266 = vpow.pop %v1265
        %v1267 = vmul.f32 %v1249, 1.442695
        %v1268 = vpow.pop %v1267
        %v1269 = vmul.f32 %v1250, 1.442695
        %v1270 = vpow.pop %v1269
        %v1271 = vmul.f32 %v1251, 1.442695
        %v1272 = vpow.pop %v1271
        %v1273 = vmul.f32 %v1252, 1.442695
        %v1274 = vpow.pop %v1273
        %v1275 = vmul.f32 %v1253, 1.442695
        %v1276 = vpow.pop %v1275
        %v1277 = vmul.f32 %v1254, 1.442695
        %v1278 = vpow.pop %v1277
        %v1279 = vmul.f32 %v1255, 1.442695
        %v1280 = vpow.pop %v1279
        %v1281 = vmul.f32 %v1256, 1.442695
        %v1282 = vpow.pop %v1281
        %v1283 = vmul.f32 %v1257, 1.442695
        %v1284 = vpow.pop %v1283
        %v1285 = vmul.f32 %v1258, 1.442695
        %v1286 = vpow.pop %v1285
        %v1287 = vmul.f32 %v1259, 1.442695
        %v1288 = vpow.pop %v1287
        %v1289 = vmul.f32 %v1260, 1.442695
        %v1290 = vpow.pop %v1289
        %v1291 = vmul.f32 %v1261, 1.442695
        %v1292 = vpow.pop %v1291
        %v1293 = vmul.f32 %v1262, 1.442695
        %v1294 = vpow.pop %v1293
        %1295 = vadd.xlane.f32.xlu0 %v1264
        %v1296 = vpop.xlane.xlu0 %1295
        %1297 = vadd.xlane.f32.xlu0 %v1266
        %v1298 = vpop.xlane.xlu0 %1297
        %1299 = vadd.xlane.f32.xlu0 %v1268
        %v1300 = vpop.xlane.xlu0 %1299
        %1301 = vadd.xlane.f32.xlu0 %v1270
        %v1302 = vpop.xlane.xlu0 %1301
        %1303 = vadd.xlane.f32.xlu0 %v1272
        %v1304 = vpop.xlane.xlu0 %1303
        %1305 = vadd.xlane.f32.xlu0 %v1274
        %v1306 = vpop.xlane.xlu0 %1305
        %1307 = vadd.xlane.f32.xlu0 %v1276
        %v1308 = vpop.xlane.xlu0 %1307
        %1309 = vadd.xlane.f32.xlu0 %v1278
        %v1310 = vpop.xlane.xlu0 %1309
        %1311 = vadd.xlane.f32.xlu0 %v1280
        %v1312 = vpop.xlane.xlu0 %1311
        %1313 = vadd.xlane.f32.xlu0 %v1282
        %v1314 = vpop.xlane.xlu0 %1313
        %1315 = vadd.xlane.f32.xlu0 %v1284
        %v1316 = vpop.xlane.xlu0 %1315
        %1317 = vadd.xlane.f32.xlu0 %v1286
        %v1318 = vpop.xlane.xlu0 %1317
        %1319 = vadd.xlane.f32.xlu0 %v1288
        %v1320 = vpop.xlane.xlu0 %1319
        %1321 = vadd.xlane.f32.xlu0 %v1290
        %v1322 = vpop.xlane.xlu0 %1321
        %1323 = vadd.xlane.f32.xlu0 %v1292
        %v1324 = vpop.xlane.xlu0 %1323
        %1325 = vadd.xlane.f32.xlu0 %v1294
        %v1326 = vpop.xlane.xlu0 %1325
        %1327 = vmatpush.msra.mxu0 %v1132
        %1328 = vmatpush.msra.mxu0 %v1129
        %1329 = vmatpush.msra.mxu0 %v1126
        %1330 = vmatpush.msra.mxu0 %v1123
        %1331 = vmatpush.msra.mxu0 %v1120
        %1332 = vmatpush.msra.mxu0 %v1117
        %1333 = vmatpush.msra.mxu0 %v1114
        %1334 = vmatpush.msra.mxu0 %v1111
        %1335 = vmatpush.msra.mxu0 %v1108
        %1336 = vmatpush.msra.mxu0 %v1105
        %1337 = vmatpush.msra.mxu0 %v1102
        %1338 = vmatpush.msra.mxu0 %v1099
        %1339 = vmatpush.msra.mxu0 %v1096
        %1340 = vmatpush.msra.mxu0 %v1093
        %1341 = vmatpush.msra.mxu0 %v1090
        %1342 = vmatpush.msra.mxu0 %v1087
        %1343 = vmatmul.f32.gmra.mxu0 %v1264
        %v1344 = vpop.f32.mrf.mxu0
        %v1345 = vadd.f32 0.0, %v1344
        %1346 = vmatmul.f32.gmra.mxu0 %v1266
        %v1347 = vpop.f32.mrf.mxu0
        %v1348 = vadd.f32 0.0, %v1347
        %1349 = vmatmul.f32.gmra.mxu0 %v1268
        %v1350 = vpop.f32.mrf.mxu0
        %v1351 = vadd.f32 0.0, %v1350
        %1352 = vmatmul.f32.gmra.mxu0 %v1270
        %v1353 = vpop.f32.mrf.mxu0
        %v1354 = vadd.f32 0.0, %v1353
        %1355 = vmatmul.f32.gmra.mxu0 %v1272
        %v1356 = vpop.f32.mrf.mxu0
        %v1357 = vadd.f32 0.0, %v1356
        %1358 = vmatmul.f32.gmra.mxu0 %v1274
        %v1359 = vpop.f32.mrf.mxu0
        %v1360 = vadd.f32 0.0, %v1359
        %1361 = vmatmul.f32.gmra.mxu0 %v1276
        %v1362 = vpop.f32.mrf.mxu0
        %v1363 = vadd.f32 0.0, %v1362
        %1364 = vmatmul.f32.gmra.mxu0 %v1278
        %v1365 = vpop.f32.mrf.mxu0
        %v1366 = vadd.f32 0.0, %v1365
        %1367 = vmatmul.f32.gmra.mxu0 %v1280
        %v1368 = vpop.f32.mrf.mxu0
        %v1369 = vadd.f32 0.0, %v1368
        %1370 = vmatmul.f32.gmra.mxu0 %v1282
        %v1371 = vpop.f32.mrf.mxu0
        %v1372 = vadd.f32 0.0, %v1371
        %1373 = vmatmul.f32.gmra.mxu0 %v1284
        %v1374 = vpop.f32.mrf.mxu0
        %v1375 = vadd.f32 0.0, %v1374
        %1376 = vmatmul.f32.gmra.mxu0 %v1286
        %v1377 = vpop.f32.mrf.mxu0
        %v1378 = vadd.f32 0.0, %v1377
        %1379 = vmatmul.f32.gmra.mxu0 %v1288
        %v1380 = vpop.f32.mrf.mxu0
        %v1381 = vadd.f32 0.0, %v1380
        %1382 = vmatmul.f32.gmra.mxu0 %v1290
        %v1383 = vpop.f32.mrf.mxu0
        %v1384 = vadd.f32 0.0, %v1383
        %1385 = vmatmul.f32.gmra.mxu0 %v1292
        %v1386 = vpop.f32.mrf.mxu0
        %v1387 = vadd.f32 0.0, %v1386
        %1388 = vmatmul.f32.gmra.mxu0 %v1294
        %v1389 = vpop.f32.mrf.mxu0
        %v1390 = vadd.f32 0.0, %v1389
        %1391 = vdwg.mxu0
        %v1392 = vrcp.pop %v1296
        %v1393 = vrcp.pop %v1298
        %v1394 = vrcp.pop %v1300
        %v1395 = vrcp.pop %v1302
        %v1396 = vrcp.pop %v1304
        %v1397 = vrcp.pop %v1306
        %v1398 = vrcp.pop %v1308
        %v1399 = vrcp.pop %v1310
        %v1400 = vrcp.pop %v1312
        %v1401 = vrcp.pop %v1314
        %v1402 = vrcp.pop %v1316
        %v1403 = vrcp.pop %v1318
        %v1404 = vrcp.pop %v1320
        %v1405 = vrcp.pop %v1322
        %v1406 = vrcp.pop %v1324
        %v1407 = vrcp.pop %v1326
        %v1408 = vmul.f32 %v1345, %v1392
        %v1409 = vmul.f32 %v1348, %v1393
        %v1410 = vmul.f32 %v1351, %v1394
        %v1411 = vmul.f32 %v1354, %v1395
        %v1412 = vmul.f32 %v1357, %v1396
        %v1413 = vmul.f32 %v1360, %v1397
        %v1414 = vmul.f32 %v1363, %v1398
        %v1415 = vmul.f32 %v1366, %v1399
        %v1416 = vmul.f32 %v1369, %v1400
        %v1417 = vmul.f32 %v1372, %v1401
        %v1418 = vmul.f32 %v1375, %v1402
        %v1419 = vmul.f32 %v1378, %v1403
        %v1420 = vmul.f32 %v1381, %v1404
        %v1421 = vmul.f32 %v1384, %v1405
        %v1422 = vmul.f32 %v1387, %v1406
        %v1423 = vmul.f32 %v1390, %v1407
        %v1424 = vld [vmem:[#allocation2] sm:$0xff]
        %v1425 = vld [vmem:[#allocation2 + $0x8] sm:$0xff]
        %v1426 = vld [vmem:[#allocation2 + $0x10] sm:$0xff]
        %v1427 = vld [vmem:[#allocation2 + $0x18] sm:$0xff]
        %v1428 = vld [vmem:[#allocation2 + $0x20] sm:$0xff]
        %v1429 = vld [vmem:[#allocation2 + $0x28] sm:$0xff]
        %v1430 = vld [vmem:[#allocation2 + $0x30] sm:$0xff]
        %v1431 = vld [vmem:[#allocation2 + $0x38] sm:$0xff]
        %v1432 = vld [vmem:[#allocation2 + $0x40] sm:$0xff]
        %v1433 = vld [vmem:[#allocation2 + $0x48] sm:$0xff]
        %v1434 = vld [vmem:[#allocation2 + $0x50] sm:$0xff]
        %v1435 = vld [vmem:[#allocation2 + $0x58] sm:$0xff]
        %v1436 = vld [vmem:[#allocation2 + $0x60] sm:$0xff]
        %v1437 = vld [vmem:[#allocation2 + $0x68] sm:$0xff]
        %v1438 = vld [vmem:[#allocation2 + $0x70] sm:$0xff]
        %v1439 = vld [vmem:[#allocation2 + $0x78] sm:$0xff]
        %v1440 = vld [vmem:[#allocation2 + $0x80] sm:$0xff]
        %v1441 = vld [vmem:[#allocation2 + $0x88] sm:$0xff]
        %v1442 = vld [vmem:[#allocation2 + $0x90] sm:$0xff]
        %v1443 = vld [vmem:[#allocation2 + $0x98] sm:$0xff]
        %v1444 = vld [vmem:[#allocation2 + $0xa0] sm:$0xff]
        %v1445 = vld [vmem:[#allocation2 + $0xa8] sm:$0xff]
        %v1446 = vld [vmem:[#allocation2 + $0xb0] sm:$0xff]
        %v1447 = vld [vmem:[#allocation2 + $0xb8] sm:$0xff]
        %v1448 = vld [vmem:[#allocation2 + $0xc0] sm:$0xff]
        %v1449 = vld [vmem:[#allocation2 + $0xc8] sm:$0xff]
        %v1450 = vld [vmem:[#allocation2 + $0xd0] sm:$0xff]
        %v1451 = vld [vmem:[#allocation2 + $0xd8] sm:$0xff]
        %v1452 = vld [vmem:[#allocation2 + $0xe0] sm:$0xff]
        %v1453 = vld [vmem:[#allocation2 + $0xe8] sm:$0xff]
        %v1454 = vld [vmem:[#allocation2 + $0xf0] sm:$0xff]
        %v1455 = vld [vmem:[#allocation2 + $0xf8] sm:$0xff]
        %v1456 = vld [vmem:[%s493] sm:$0xff]
        %v1457 = vld [vmem:[%s493 + $0x8] sm:$0xff]
        %v1458 = vld [vmem:[%s493 + $0x10] sm:$0xff]
        %v1459 = vld [vmem:[%s493 + $0x18] sm:$0xff]
        %v1460 = vld [vmem:[%s493 + $0x20] sm:$0xff]
        %v1461 = vld [vmem:[%s493 + $0x28] sm:$0xff]
        %v1462 = vld [vmem:[%s493 + $0x30] sm:$0xff]
        %v1463 = vld [vmem:[%s493 + $0x38] sm:$0xff]
        %v1464 = vld [vmem:[%s493 + $0x40] sm:$0xff]
        %v1465 = vld [vmem:[%s493 + $0x48] sm:$0xff]
        %v1466 = vld [vmem:[%s493 + $0x50] sm:$0xff]
        %v1467 = vld [vmem:[%s493 + $0x58] sm:$0xff]
        %v1468 = vld [vmem:[%s493 + $0x60] sm:$0xff]
        %v1469 = vld [vmem:[%s493 + $0x68] sm:$0xff]
        %v1470 = vld [vmem:[%s493 + $0x70] sm:$0xff]
        %v1471 = vld [vmem:[%s493 + $0x78] sm:$0xff]
        %v1472 = vld [vmem:[%s493 + $0x80] sm:$0xff]
        %v1473 = vld [vmem:[%s493 + $0x88] sm:$0xff]
        %v1474 = vld [vmem:[%s493 + $0x90] sm:$0xff]
        %v1475 = vld [vmem:[%s493 + $0x98] sm:$0xff]
        %v1476 = vld [vmem:[%s493 + $0xa0] sm:$0xff]
        %v1477 = vld [vmem:[%s493 + $0xa8] sm:$0xff]
        %v1478 = vld [vmem:[%s493 + $0xb0] sm:$0xff]
        %v1479 = vld [vmem:[%s493 + $0xb8] sm:$0xff]
        %v1480 = vld [vmem:[%s493 + $0xc0] sm:$0xff]
        %v1481 = vld [vmem:[%s493 + $0xc8] sm:$0xff]
        %v1482 = vld [vmem:[%s493 + $0xd0] sm:$0xff]
        %v1483 = vld [vmem:[%s493 + $0xd8] sm:$0xff]
        %v1484 = vld [vmem:[%s493 + $0xe0] sm:$0xff]
        %v1485 = vld [vmem:[%s493 + $0xe8] sm:$0xff]
        %v1486 = vld [vmem:[%s493 + $0xf0] sm:$0xff]
        %v1487 = vld [vmem:[%s493 + $0xf8] sm:$0xff]
        %1488 = vmatpush.msra.mxu0 %v1486
        %1489 = vmatpush.msra.mxu0 %v1484
        %1490 = vmatpush.msra.mxu0 %v1482
        %1491 = vmatpush.msra.mxu0 %v1480
        %1492 = vmatpush.msra.mxu0 %v1478
        %1493 = vmatpush.msra.mxu0 %v1476
        %1494 = vmatpush.msra.mxu0 %v1474
        %1495 = vmatpush.msra.mxu0 %v1472
        %1496 = vmatpush.msra.mxu0 %v1470
        %1497 = vmatpush.msra.mxu0 %v1468
        %1498 = vmatpush.msra.mxu0 %v1466
        %1499 = vmatpush.msra.mxu0 %v1464
        %1500 = vmatpush.msra.mxu0 %v1462
        %1501 = vmatpush.msra.mxu0 %v1460
        %1502 = vmatpush.msra.mxu0 %v1458
        %1503 = vmatpush.msra.mxu0 %v1456
        %1504 = vmatmul.f32.gmra.mxu0 %v1408
        %v1505 = vpop.f32.mrf.mxu0
        %v1506 = vadd.f32 0.0, %v1505
        %1507 = vmatmul.f32.gmra.mxu0 %v1409
        %v1508 = vpop.f32.mrf.mxu0
        %v1509 = vadd.f32 0.0, %v1508
        %1510 = vmatmul.f32.gmra.mxu0 %v1410
        %v1511 = vpop.f32.mrf.mxu0
        %v1512 = vadd.f32 0.0, %v1511
        %1513 = vmatmul.f32.gmra.mxu0 %v1411
        %v1514 = vpop.f32.mrf.mxu0
        %v1515 = vadd.f32 0.0, %v1514
        %1516 = vmatmul.f32.gmra.mxu0 %v1412
        %v1517 = vpop.f32.mrf.mxu0
        %v1518 = vadd.f32 0.0, %v1517
        %1519 = vmatmul.f32.gmra.mxu0 %v1413
        %v1520 = vpop.f32.mrf.mxu0
        %v1521 = vadd.f32 0.0, %v1520
        %1522 = vmatmul.f32.gmra.mxu0 %v1414
        %v1523 = vpop.f32.mrf.mxu0
        %v1524 = vadd.f32 0.0, %v1523
        %1525 = vmatmul.f32.gmra.mxu0 %v1415
        %v1526 = vpop.f32.mrf.mxu0
        %v1527 = vadd.f32 0.0, %v1526
        %1528 = vmatmul.f32.gmra.mxu0 %v1416
        %v1529 = vpop.f32.mrf.mxu0
        %v1530 = vadd.f32 0.0, %v1529
        %1531 = vmatmul.f32.gmra.mxu0 %v1417
        %v1532 = vpop.f32.mrf.mxu0
        %v1533 = vadd.f32 0.0, %v1532
        %1534 = vmatmul.f32.gmra.mxu0 %v1418
        %v1535 = vpop.f32.mrf.mxu0
        %v1536 = vadd.f32 0.0, %v1535
        %1537 = vmatmul.f32.gmra.mxu0 %v1419
        %v1538 = vpop.f32.mrf.mxu0
        %v1539 = vadd.f32 0.0, %v1538
        %1540 = vmatmul.f32.gmra.mxu0 %v1420
        %v1541 = vpop.f32.mrf.mxu0
        %v1542 = vadd.f32 0.0, %v1541
        %1543 = vmatmul.f32.gmra.mxu0 %v1421
        %v1544 = vpop.f32.mrf.mxu0
        %v1545 = vadd.f32 0.0, %v1544
        %1546 = vmatmul.f32.gmra.mxu0 %v1422
        %v1547 = vpop.f32.mrf.mxu0
        %v1548 = vadd.f32 0.0, %v1547
        %1549 = vmatmul.f32.gmra.mxu0 %v1423
        %v1550 = vpop.f32.mrf.mxu0
        %v1551 = vadd.f32 0.0, %v1550
        %1552 = vdwg.mxu0
        %1553 = vmatpush.msra.mxu0 %v1487
        %1554 = vmatpush.msra.mxu0 %v1485
        %1555 = vmatpush.msra.mxu0 %v1483
        %1556 = vmatpush.msra.mxu0 %v1481
        %1557 = vmatpush.msra.mxu0 %v1479
        %1558 = vmatpush.msra.mxu0 %v1477
        %1559 = vmatpush.msra.mxu0 %v1475
        %1560 = vmatpush.msra.mxu0 %v1473
        %1561 = vmatpush.msra.mxu0 %v1471
        %1562 = vmatpush.msra.mxu0 %v1469
        %1563 = vmatpush.msra.mxu0 %v1467
        %1564 = vmatpush.msra.mxu0 %v1465
        %1565 = vmatpush.msra.mxu0 %v1463
        %1566 = vmatpush.msra.mxu0 %v1461
        %1567 = vmatpush.msra.mxu0 %v1459
        %1568 = vmatpush.msra.mxu0 %v1457
        %1569 = vmatmul.f32.gmra.mxu0 %v1408
        %v1570 = vpop.f32.mrf.mxu0
        %v1571 = vadd.f32 0.0, %v1570
        %1572 = vmatmul.f32.gmra.mxu0 %v1409
        %v1573 = vpop.f32.mrf.mxu0
        %v1574 = vadd.f32 0.0, %v1573
        %1575 = vmatmul.f32.gmra.mxu0 %v1410
        %v1576 = vpop.f32.mrf.mxu0
        %v1577 = vadd.f32 0.0, %v1576
        %1578 = vmatmul.f32.gmra.mxu0 %v1411
        %v1579 = vpop.f32.mrf.mxu0
        %v1580 = vadd.f32 0.0, %v1579
        %1581 = vmatmul.f32.gmra.mxu0 %v1412
        %v1582 = vpop.f32.mrf.mxu0
        %v1583 = vadd.f32 0.0, %v1582
        %1584 = vmatmul.f32.gmra.mxu0 %v1413
        %v1585 = vpop.f32.mrf.mxu0
        %v1586 = vadd.f32 0.0, %v1585
        %1587 = vmatmul.f32.gmra.mxu0 %v1414
        %v1588 = vpop.f32.mrf.mxu0
        %v1589 = vadd.f32 0.0, %v1588
        %1590 = vmatmul.f32.gmra.mxu0 %v1415
        %v1591 = vpop.f32.mrf.mxu0
        %v1592 = vadd.f32 0.0, %v1591
        %1593 = vmatmul.f32.gmra.mxu0 %v1416
        %v1594 = vpop.f32.mrf.mxu0
        %v1595 = vadd.f32 0.0, %v1594
        %1596 = vmatmul.f32.gmra.mxu0 %v1417
        %v1597 = vpop.f32.mrf.mxu0
        %v1598 = vadd.f32 0.0, %v1597
        %1599 = vmatmul.f32.gmra.mxu0 %v1418
        %v1600 = vpop.f32.mrf.mxu0
        %v1601 = vadd.f32 0.0, %v1600
        %1602 = vmatmul.f32.gmra.mxu0 %v1419
        %v1603 = vpop.f32.mrf.mxu0
        %v1604 = vadd.f32 0.0, %v1603
        %1605 = vmatmul.f32.gmra.mxu0 %v1420
        %v1606 = vpop.f32.mrf.mxu0
        %v1607 = vadd.f32 0.0, %v1606
        %1608 = vmatmul.f32.gmra.mxu0 %v1421
        %v1609 = vpop.f32.mrf.mxu0
        %v1610 = vadd.f32 0.0, %v1609
        %1611 = vmatmul.f32.gmra.mxu0 %v1422
        %v1612 = vpop.f32.mrf.mxu0
        %v1613 = vadd.f32 0.0, %v1612
        %1614 = vmatmul.f32.gmra.mxu0 %v1423
        %v1615 = vpop.f32.mrf.mxu0
        %v1616 = vadd.f32 0.0, %v1615
        %1617 = vdwg.mxu0
        %v1618 = vadd.f32 %v1424, %v1506
        %v1619 = vadd.f32 %v1425, %v1571
        %v1620 = vadd.f32 %v1426, %v1509
        %v1621 = vadd.f32 %v1427, %v1574
        %v1622 = vadd.f32 %v1428, %v1512
        %v1623 = vadd.f32 %v1429, %v1577
        %v1624 = vadd.f32 %v1430, %v1515
        %v1625 = vadd.f32 %v1431, %v1580
        %v1626 = vadd.f32 %v1432, %v1518
        %v1627 = vadd.f32 %v1433, %v1583
        %v1628 = vadd.f32 %v1434, %v1521
        %v1629 = vadd.f32 %v1435, %v1586
        %v1630 = vadd.f32 %v1436, %v1524
        %v1631 = vadd.f32 %v1437, %v1589
        %v1632 = vadd.f32 %v1438, %v1527
        %v1633 = vadd.f32 %v1439, %v1592
        %v1634 = vadd.f32 %v1440, %v1530
        %v1635 = vadd.f32 %v1441, %v1595
        %v1636 = vadd.f32 %v1442, %v1533
        %v1637 = vadd.f32 %v1443, %v1598
        %v1638 = vadd.f32 %v1444, %v1536
        %v1639 = vadd.f32 %v1445, %v1601
        %v1640 = vadd.f32 %v1446, %v1539
        %v1641 = vadd.f32 %v1447, %v1604
        %v1642 = vadd.f32 %v1448, %v1542
        %v1643 = vadd.f32 %v1449, %v1607
        %v1644 = vadd.f32 %v1450, %v1545
        %v1645 = vadd.f32 %v1451, %v1610
        %v1646 = vadd.f32 %v1452, %v1548
        %v1647 = vadd.f32 %v1453, %v1613
        %v1648 = vadd.f32 %v1454, %v1551
        %v1649 = vadd.f32 %v1455, %v1616
        %1650 = vst [vmem:[#allocation2] sm:$0xff] %v1618
        %1651 = vst [vmem:[#allocation2 + $0x8] sm:$0xff] %v1619
        %1652 = vst [vmem:[#allocation2 + $0x10] sm:$0xff] %v1620
        %1653 = vst [vmem:[#allocation2 + $0x18] sm:$0xff] %v1621
        %1654 = vst [vmem:[#allocation2 + $0x20] sm:$0xff] %v1622
        %1655 = vst [vmem:[#allocation2 + $0x28] sm:$0xff] %v1623
        %1656 = vst [vmem:[#allocation2 + $0x30] sm:$0xff] %v1624
        %1657 = vst [vmem:[#allocation2 + $0x38] sm:$0xff] %v1625
        %1658 = vst [vmem:[#allocation2 + $0x40] sm:$0xff] %v1626
        %1659 = vst [vmem:[#allocation2 + $0x48] sm:$0xff] %v1627
        %1660 = vst [vmem:[#allocation2 + $0x50] sm:$0xff] %v1628
        %1661 = vst [vmem:[#allocation2 + $0x58] sm:$0xff] %v1629
        %1662 = vst [vmem:[#allocation2 + $0x60] sm:$0xff] %v1630
        %1663 = vst [vmem:[#allocation2 + $0x68] sm:$0xff] %v1631
        %1664 = vst [vmem:[#allocation2 + $0x70] sm:$0xff] %v1632
        %1665 = vst [vmem:[#allocation2 + $0x78] sm:$0xff] %v1633
        %1666 = vst [vmem:[#allocation2 + $0x80] sm:$0xff] %v1634
        %1667 = vst [vmem:[#allocation2 + $0x88] sm:$0xff] %v1635
        %1668 = vst [vmem:[#allocation2 + $0x90] sm:$0xff] %v1636
        %1669 = vst [vmem:[#allocation2 + $0x98] sm:$0xff] %v1637
        %1670 = vst [vmem:[#allocation2 + $0xa0] sm:$0xff] %v1638
        %1671 = vst [vmem:[#allocation2 + $0xa8] sm:$0xff] %v1639
        %1672 = vst [vmem:[#allocation2 + $0xb0] sm:$0xff] %v1640
        %1673 = vst [vmem:[#allocation2 + $0xb8] sm:$0xff] %v1641
        %1674 = vst [vmem:[#allocation2 + $0xc0] sm:$0xff] %v1642
        %1675 = vst [vmem:[#allocation2 + $0xc8] sm:$0xff] %v1643
        %1676 = vst [vmem:[#allocation2 + $0xd0] sm:$0xff] %v1644
        %1677 = vst [vmem:[#allocation2 + $0xd8] sm:$0xff] %v1645
        %1678 = vst [vmem:[#allocation2 + $0xe0] sm:$0xff] %v1646
        %1679 = vst [vmem:[#allocation2 + $0xe8] sm:$0xff] %v1647
        %1680 = vst [vmem:[#allocation2 + $0xf0] sm:$0xff] %v1648
        %1681 = vst [vmem:[#allocation2 + $0xf8] sm:$0xff] %v1649
        %p1682 = scmp.eq.s32.totalorder %s37, 1
        // Predicated region
        $region81: #{multi_head_self_attention.1} parent=55 // pred_check
          %p1683 = pneg %p1682
        $region82: #{multi_head_self_attention.1} parent=55 // pred_check_branch
          %1685 = sbr.rel (%p1683) target = $region84
        $region83: #{multi_head_self_attention.1} parent=55 // pred_region
          %v1686 = vld [vmem:[#allocation2] sm:$0xff]
          %v1687 = vld [vmem:[#allocation2 + $0x8] sm:$0xff]
          %v1688 = vld [vmem:[#allocation2 + $0x10] sm:$0xff]
          %v1689 = vld [vmem:[#allocation2 + $0x18] sm:$0xff]
          %v1690 = vld [vmem:[#allocation2 + $0x20] sm:$0xff]
          %v1691 = vld [vmem:[#allocation2 + $0x28] sm:$0xff]
          %v1692 = vld [vmem:[#allocation2 + $0x30] sm:$0xff]
          %v1693 = vld [vmem:[#allocation2 + $0x38] sm:$0xff]
          %v1694 = vld [vmem:[#allocation2 + $0x40] sm:$0xff]
          %v1695 = vld [vmem:[#allocation2 + $0x48] sm:$0xff]
          %v1696 = vld [vmem:[#allocation2 + $0x50] sm:$0xff]
          %v1697 = vld [vmem:[#allocation2 + $0x58] sm:$0xff]
          %v1698 = vld [vmem:[#allocation2 + $0x60] sm:$0xff]
          %v1699 = vld [vmem:[#allocation2 + $0x68] sm:$0xff]
          %v1700 = vld [vmem:[#allocation2 + $0x70] sm:$0xff]
          %v1701 = vld [vmem:[#allocation2 + $0x78] sm:$0xff]
          %v1702 = vld [vmem:[#allocation2 + $0x80] sm:$0xff]
          %v1703 = vld [vmem:[#allocation2 + $0x88] sm:$0xff]
          %v1704 = vld [vmem:[#allocation2 + $0x90] sm:$0xff]
          %v1705 = vld [vmem:[#allocation2 + $0x98] sm:$0xff]
          %v1706 = vld [vmem:[#allocation2 + $0xa0] sm:$0xff]
          %v1707 = vld [vmem:[#allocation2 + $0xa8] sm:$0xff]
          %v1708 = vld [vmem:[#allocation2 + $0xb0] sm:$0xff]
          %v1709 = vld [vmem:[#allocation2 + $0xb8] sm:$0xff]
          %v1710 = vld [vmem:[#allocation2 + $0xc0] sm:$0xff]
          %v1711 = vld [vmem:[#allocation2 + $0xc8] sm:$0xff]
          %v1712 = vld [vmem:[#allocation2 + $0xd0] sm:$0xff]
          %v1713 = vld [vmem:[#allocation2 + $0xd8] sm:$0xff]
          %v1714 = vld [vmem:[#allocation2 + $0xe0] sm:$0xff]
          %v1715 = vld [vmem:[#allocation2 + $0xe8] sm:$0xff]
          %v1716 = vld [vmem:[#allocation2 + $0xf0] sm:$0xff]
          %v1717 = vld [vmem:[#allocation2 + $0xf8] sm:$0xff]
          %v1718 = vld [vmem:[%s8] sm:$0x3]
          %v1720 = vperm.slane %v1718, 0
          %v1721 = vperm.slane %v1718, 1
          %v1724 = vadd.f32 %v1686, %v1720
          %v1725 = vadd.f32 %v1687, %v1721
          %v1726 = vadd.f32 %v1688, %v1720
          %v1727 = vadd.f32 %v1689, %v1721
          %v1728 = vadd.f32 %v1690, %v1720
          %v1729 = vadd.f32 %v1691, %v1721
          %v1730 = vadd.f32 %v1692, %v1720
          %v1731 = vadd.f32 %v1693, %v1721
          %v1732 = vadd.f32 %v1694, %v1720
          %v1733 = vadd.f32 %v1695, %v1721
          %v1734 = vadd.f32 %v1696, %v1720
          %v1735 = vadd.f32 %v1697, %v1721
          %v1736 = vadd.f32 %v1698, %v1720
          %v1737 = vadd.f32 %v1699, %v1721
          %v1738 = vadd.f32 %v1700, %v1720
          %v1739 = vadd.f32 %v1701, %v1721
          %v1740 = vadd.f32 %v1702, %v1720
          %v1741 = vadd.f32 %v1703, %v1721
          %v1742 = vadd.f32 %v1704, %v1720
          %v1743 = vadd.f32 %v1705, %v1721
          %v1744 = vadd.f32 %v1706, %v1720
          %v1745 = vadd.f32 %v1707, %v1721
          %v1746 = vadd.f32 %v1708, %v1720
          %v1747 = vadd.f32 %v1709, %v1721
          %v1748 = vadd.f32 %v1710, %v1720
          %v1749 = vadd.f32 %v1711, %v1721
          %v1750 = vadd.f32 %v1712, %v1720
          %v1751 = vadd.f32 %v1713, %v1721
          %v1752 = vadd.f32 %v1714, %v1720
          %v1753 = vadd.f32 %v1715, %v1721
          %v1754 = vadd.f32 %v1716, %v1720
          %v1755 = vadd.f32 %v1717, %v1721
          %1756 = vst [vmem:[%s557] sm:$0xff] %v1724
          %1757 = vst [vmem:[%s557 + $0x8] sm:$0xff] %v1725
          %1758 = vst [vmem:[%s557 + $0x10] sm:$0xff] %v1726
          %1759 = vst [vmem:[%s557 + $0x18] sm:$0xff] %v1727
          %1760 = vst [vmem:[%s557 + $0x20] sm:$0xff] %v1728
          %1761 = vst [vmem:[%s557 + $0x28] sm:$0xff] %v1729
          %1762 = vst [vmem:[%s557 + $0x30] sm:$0xff] %v1730
          %1763 = vst [vmem:[%s557 + $0x38] sm:$0xff] %v1731
          %1764 = vst [vmem:[%s557 + $0x40] sm:$0xff] %v1732
          %1765 = vst [vmem:[%s557 + $0x48] sm:$0xff] %v1733
          %1766 = vst [vmem:[%s557 + $0x50] sm:$0xff] %v1734
          %1767 = vst [vmem:[%s557 + $0x58] sm:$0xff] %v1735
          %1768 = vst [vmem:[%s557 + $0x60] sm:$0xff] %v1736
          %1769 = vst [vmem:[%s557 + $0x68] sm:$0xff] %v1737
          %1770 = vst [vmem:[%s557 + $0x70] sm:$0xff] %v1738
          %1771 = vst [vmem:[%s557 + $0x78] sm:$0xff] %v1739
          %1772 = vst [vmem:[%s557 + $0x80] sm:$0xff] %v1740
          %1773 = vst [vmem:[%s557 + $0x88] sm:$0xff] %v1741
          %1774 = vst [vmem:[%s557 + $0x90] sm:$0xff] %v1742
          %1775 = vst [vmem:[%s557 + $0x98] sm:$0xff] %v1743
          %1776 = vst [vmem:[%s557 + $0xa0] sm:$0xff] %v1744
          %1777 = vst [vmem:[%s557 + $0xa8] sm:$0xff] %v1745
          %1778 = vst [vmem:[%s557 + $0xb0] sm:$0xff] %v1746
          %1779 = vst [vmem:[%s557 + $0xb8] sm:$0xff] %v1747
          %1780 = vst [vmem:[%s557 + $0xc0] sm:$0xff] %v1748
          %1781 = vst [vmem:[%s557 + $0xc8] sm:$0xff] %v1749
          %1782 = vst [vmem:[%s557 + $0xd0] sm:$0xff] %v1750
          %1783 = vst [vmem:[%s557 + $0xd8] sm:$0xff] %v1751
          %1784 = vst [vmem:[%s557 + $0xe0] sm:$0xff] %v1752
          %1785 = vst [vmem:[%s557 + $0xe8] sm:$0xff] %v1753
          %1786 = vst [vmem:[%s557 + $0xf0] sm:$0xff] %v1754
          %1787 = vst [vmem:[%s557 + $0xf8] sm:$0xff] %v1755
        $region84: #{multi_head_self_attention.1} parent=55 // pred_fallthru
          _
        %s1788 = sand.u32 %s281, 1
        %s1789 = scalar_lea.sflag [#allocation5], %s1788
        %s1790 = sand.u32 %s281, 1
        %s1791 = smul.addr %s1790, 256
        %s1792 = scalar_lea.vmem [#allocation12], %s1791
        // Predicated region
        $region85: #{multi_head_self_attention.1} parent=55 // pred_check
          %p1793 = pneg %p291
        $region86: #{multi_head_self_attention.1} parent=55 // pred_check_branch
          %1795 = sbr.rel (%p1793) target = $region88
        $region87: #{multi_head_self_attention.1} parent=55 // pred_region
          %1797 = vsyncadd %s1789, 0
          %s1798 = smul.addr %s36, 32
          %s1799 = smul.addr %s1798, 8
          %s1800 = scalar_lea.hbm %s9, %s1799
          %s1801 = sshll.u32 %s1792, 4
          %s1802 = int_to_ptr.vmem [resolvable:$true] %s1801
          %s1803 = sshll.u32 %s1800, 4
          %s1804 = int_to_ptr.hbm [resolvable:$true] %s1803
          %1809 = dma.vmem_to_hbm [thread:$0]  %s1802, 4096, %s1804, %s1789, 256, 256, 16
        $region88: #{multi_head_self_attention.1} parent=55 // pred_fallthru
          _
      $region56: #{multi_head_self_attention.1} parent=5 // pred_fallthru
        _
      %p1810 = scmp.le.s32.totalorder 2, %s27
      // Predicated region
      $region89: #{multi_head_self_attention.1} parent=5 // pred_check
        %p1811 = pneg %p1810
      $region90: #{multi_head_self_attention.1} parent=5 // pred_check_branch
        %1813 = sbr.rel (%p1811) target = $region92
      $region91: #{multi_head_self_attention.1} parent=5 // pred_region
        %s1814 = ssub.s32 %s27, 2
        // Predicated region
        $region93: #{multi_head_self_attention.1} parent=91 // pred_check
          %p1815 = pneg %p297
        $region94: #{multi_head_self_attention.1} parent=91 // pred_check_branch
          %1817 = sbr.rel (%p1815) target = $region96
        $region95: #{multi_head_self_attention.1} parent=91 // pred_region
          %s1818 = sand.u32 %s282, 1
          %s1819 = scalar_lea.sflag [#allocation5], %s1818
          %s1820 = sand.u32 %s282, 1
          %s1821 = smul.addr %s1820, 256
          %s1822 = scalar_lea.vmem [#allocation12], %s1821
          %1824 = dma.done %s1819, 4096
        $region96: #{multi_head_self_attention.1} parent=91 // pred_fallthru
          _
      $region92: #{multi_head_self_attention.1} parent=5 // pred_fallthru
        _
    $region6: #{multi_head_self_attention.1} parent=1 // loop_footer
      %s31 = sadd.s32 1, %s27
    $region7: #{multi_head_self_attention.1} parent=1 // loop_footer_branch
      %26 = sbr.rel target = $region3
    $region8: #{multi_head_self_attention.1} parent=1 // loop_exit
      _
    %1825 = vsyncpa [#allocation4], 1
    %s1826 = scalar_lea.sflag [#allocation4], 1
    %1827 = vsyncpa %s1826, 1
    %1828 = vsyncpa [#allocation7], 1
    %s1829 = scalar_lea.sflag [#allocation7], 1
    %1830 = vsyncpa %s1829, 1
    %1831 = vsyncpa [#allocation10], 1
    %s1832 = scalar_lea.sflag [#allocation10], 1
    %1833 = vsyncpa %s1832, 1
    %1834 = vsyncpa [#allocation5], 1
    %s1835 = scalar_lea.sflag [#allocation5], 1
    %1836 = vsyncpa %s1835, 1

</llo_original>
